<compile_context>
chip_gen: v7x
topology: tpu7x:2x2x1
jax: 0.10.0
libtpu: 0.0.40
codegen_flags: <defaults>
</compile_context>

<pallas_src>
import functools

import jax
import jax.numpy as jnp
from jax.experimental import pallas as pl
from jax.experimental.pallas import tpu as pltpu


def _upsample_nearest_2x(x_nchw):
    # F.interpolate(scale_factor=2, mode='nearest') on NCHW via broadcast+reshape.
    b, c, h, w = x_nchw.shape
    x = jnp.broadcast_to(x_nchw[:, :, :, None, :, None], (b, c, h, 2, w, 2))
    return x.reshape(b, c, 2 * h, 2 * w)


def _plan_hw(hw, bytes_per_lane, target_bytes=4 << 20,
             max_single_block_bytes=8 << 20):
    """Choose (hw_pad, hw_tile) for the upsampled-resolution lane axis.

    hw_tile is a multiple of 512 dividing hw_pad (so hw_tile // 4 is a
    lane-aligned tile for the ORIGINAL-resolution high features in pass 1),
    except in the small-unaligned fallback where a single full-extent block is
    used (hw_pad == hw_tile == hw, allowed via the full-dim escape).
    """
    target_tile = max(512, (target_bytes // max(bytes_per_lane, 1)) // 512 * 512)
    if hw % 512 == 0:
        t = min(hw, target_tile)
        while hw % t:
            t -= 512
        return hw, t
    if hw * bytes_per_lane <= max_single_block_bytes:
        return hw, hw                      # single full block, no padding copy
    hw_pad = ((hw + 511) // 512) * 512     # pad lanes; pooling/conv stay exact
    t = min(hw_pad, target_tile)
    while hw_pad % t:
        t -= 512
    return hw_pad, t


def _vmem_limit(step_bytes):
    # Double-buffered streamed blocks + generous margin for f32 temporaries and
    # resident weights.  Capped at 48 MiB so it is safe on v7x (64 MiB physical
    # VMEM) as well as v5e/v6e (128 MiB); floor above v5e's 16 MiB default.
    return int(min(max(3 * step_bytes + (8 << 20), 16 << 20), 48 << 20))


def _gate_kernel(high_ref, low_ref, w1h_ref, w1l_ref, w2t_ref, gate_ref,
                 acc_hi_ref, acc_lo_ref, *, inv_hw_high, inv_hw_low):
    """Pass 1: tiled global average pool + SE MLP + sigmoid -> (1, C) gate row.

    high_ref : (1, C_high, hw_hi_t)  ORIGINAL-resolution high features
    low_ref  : (1, C_low,  hw_t)     low features (upsampled resolution)
    w1h_ref  : (C_high, hid)  fc1 weight slice (transposed, high channels)
    w1l_ref  : (C_low,  hid)  fc1 weight slice (transposed, low channels)
    w2t_ref  : (hid, C)       fc2 weight (transposed)
    gate_ref : (1, 1, C)      sigmoid gate (f32), lane-major, resident over hw
    """
    t = pl.program_id(1)

    @pl.when(t == 0)
    def _():
        acc_hi_ref[...] = jnp.zeros_like(acc_hi_ref)
        acc_lo_ref[...] = jnp.zeros_like(acc_lo_ref)

    # Per-tile partial channel sums accumulated in f32 scratch; features are
    # consumed in their native dtype (zero padding on the lane axis is inert).
    acc_hi_ref[...] += jnp.sum(high_ref[0], axis=-1, keepdims=True,
                               dtype=jnp.float32)
    acc_lo_ref[...] += jnp.sum(low_ref[0], axis=-1, keepdims=True,
                               dtype=jnp.float32)

    @pl.when(t == pl.num_programs(1) - 1)
    def _():
        # Nearest-2x upsample is mean-preserving, so pooling the original-
        # resolution high features with 1/(H*W) equals pooling the upsampled
        # tensor with 1/(4*H*W).
        y_hi = acc_hi_ref[...] * inv_hw_high                # (C_high, 1) f32
        y_lo = acc_lo_ref[...] * inv_hw_low                 # (C_low,  1) f32
        # fc1 (bias-free): tiny, so broadcast-multiply + sublane reduce (VPU/XLU).
        h = (jnp.sum(w1h_ref[...].astype(jnp.float32) * y_hi,
                     axis=0, keepdims=True)
             + jnp.sum(w1l_ref[...].astype(jnp.float32) * y_lo,
                       axis=0, keepdims=True))              # (1, hid)
        h = jnp.maximum(h, 0.0)
        # fc2 (bias-free) as a row so the gate is stored lane-major.
        g = jnp.dot(h, w2t_ref[...].astype(jnp.float32),
                    preferred_element_type=jnp.float32)      # (1, C)
        gate_ref[0] = jax.nn.sigmoid(g).astype(gate_ref.dtype)


def _conv_kernel(gate_ref, high_ref, low_ref, wch_ref, wcl_ref, bias_ref,
                 out_ref, *, c_high):
    """Pass 2: sigmoid gate folded into the 1x1-conv weight, conv + bias + ReLU.

    gate_ref : (1, 1, C)          f32 gate (resident per batch)
    high_ref : (1, C_high, hw_t)  upsampled high features
    low_ref  : (1, C_low,  hw_t)
    wch_ref  : (Cout, C_high)     wcl_ref : (Cout, C_low)
    bias_ref : (Cout, 1)          out_ref : (1, Cout, hw_t)
    """
    feat_dtype = high_ref.dtype
    g_hi = gate_ref[0, :, :c_high]                          # (1, C_high) f32
    g_lo = gate_ref[0, :, c_high:]                          # (1, C_low)  f32
    # Gate folding: relu(Wc @ (g*feat) + b) == relu((Wc*g) @ feat + b).  Exact
    # in f32; with bf16 features it rounds the folded weight rather than the
    # gated activation (tiny divergence).
    w_hi = (wch_ref[...].astype(jnp.float32) * g_hi).astype(feat_dtype)
    w_lo = (wcl_ref[...].astype(jnp.float32) * g_lo).astype(feat_dtype)

    acc = jnp.dot(w_hi, high_ref[0], preferred_element_type=jnp.float32)
    acc = acc + jnp.dot(w_lo, low_ref[0], preferred_element_type=jnp.float32)
    acc = acc + bias_ref[...]                 # (Cout, 1) broadcasts over lanes
    out_ref[0] = jnp.maximum(acc, 0.0).astype(out_ref.dtype)


@functools.partial(jax.jit, static_argnames=("hw_tile",))
def fse_module_forward(high_features, low_features_list, params, hw_tile=None):
    """fSEModule.forward.

    high_features     : (B, C_high, H, W)            NCHW
    low_features_list : list of (B, C_low_i, 2H, 2W) NCHW
    params            : fc1_w (hid, C), fc2_w (C, hid),
                        conv_w (Cout, C, 1, 1), conv_b (Cout,)
    returns           : (B, Cout, 2H, 2W) NCHW (matches the PyTorch module)
    """
    lows = list(low_features_list)
    low_nchw = lows[0] if len(lows) == 1 else jnp.concatenate(lows, axis=1)

    B, c_high, H, W = high_features.shape
    _, c_low, H2, W2 = low_nchw.shape
    assert H2 == 2 * H and W2 == 2 * W, "low features must be 2x the high resolution"
    c_in = c_high + c_low
    hw_hi = H * W
    hw = H2 * W2
    feat_dtype = high_features.dtype

    # NCHW -> (B, C, H*W): pure reshapes (channels on sublanes, spatial on lanes).
    high_lr = high_features.reshape(B, c_high, hw_hi)       # original resolution
    low = low_nchw.reshape(B, c_low, hw)

    # Pass 2 still consumes the materialized nearest-2x upsample of high.
    # TODO(synk): fuse the 2x2 expansion into _conv_kernel to remove this HBM
    # round trip entirely (pass 1 already avoids it).
    high_up = _upsample_nearest_2x(high_features).reshape(B, c_high, hw)

    # Weights, split along the concatenated channel axis so the channel concat
    # of [upsample(high)] + low is never materialized.
    fc1_w = params["fc1_w"]                                  # (hid, C)
    hid = fc1_w.shape[0]
    w1h_t = fc1_w[:, :c_high].T                              # (C_high, hid)
    w1l_t = fc1_w[:, c_high:].T                              # (C_low,  hid)
    w2t = params["fc2_w"].T                                  # (hid, C)
    wc = params["conv_w"][:, :, 0, 0]                        # (Cout, C): 1x1 conv == matmul
    c_out = wc.shape[0]
    wch = wc[:, :c_high]                                     # (Cout, C_high)
    wcl = wc[:, c_high:]                                     # (Cout, C_low)
    bias = params["conv_b"].reshape(c_out, 1).astype(jnp.float32)

    itemsize = jnp.dtype(feat_dtype).itemsize
    bytes_per_lane = (c_in + c_out) * itemsize
    if hw_tile is None:
        hw_pad, tile = _plan_hw(hw, bytes_per_lane)
    else:
        assert hw % hw_tile == 0 and (hw_tile % 512 == 0 or hw_tile == hw), \
            "hw_tile must divide H2*W2 and be a multiple of 512 (or the full extent)"
        hw_pad, tile = hw, hw_tile

    if hw_pad != hw:
        # Zero-pad the lane axis up to the tile grid: pooling stays exact (the
        # inv factors below use the true extents) and padded output lanes are
        # sliced off after the call.
        low = jnp.pad(low, ((0, 0), (0, 0), (0, hw_pad - hw)))
        high_up = jnp.pad(high_up, ((0, 0), (0, 0), (0, hw_pad - hw)))
        high_lr = jnp.pad(high_lr, ((0, 0), (0, 0), (0, hw_pad // 4 - hw_hi)))

    n_hw = hw_pad // tile
    tile_hi = tile // 4      # hw = 4*H*W, so tile is always divisible by 4

    # ---- Pass 1: tiled global average pool + SE MLP -> (B, 1, C) gate ------
    p1_step_bytes = (c_high * tile_hi + c_low * tile) * itemsize
    gate = pl.pallas_call(
        functools.partial(_gate_kernel,
                          inv_hw_high=1.0 / hw_hi, inv_hw_low=1.0 / hw),
        grid=(B, n_hw),
        in_specs=[
            pl.BlockSpec((1, c_high, tile_hi), lambda b, t: (b, 0, t)),
            pl.BlockSpec((1, c_low, tile), lambda b, t: (b, 0, t)),
            pl.BlockSpec((c_high, hid), lambda b, t: (0, 0)),
            pl.BlockSpec((c_low, hid), lambda b, t: (0, 0)),
            pl.BlockSpec((hid, c_in), lambda b, t: (0, 0)),
        ],
        out_specs=pl.BlockSpec((1, 1, c_in), lambda b, t: (b, 0, 0)),
        out_shape=jax.ShapeDtypeStruct((B, 1, c_in), jnp.float32),
        scratch_shapes=[pltpu.VMEM((c_high, 1), jnp.float32),
                        pltpu.VMEM((c_low, 1), jnp.float32)],
        compiler_params=pltpu.CompilerParams(
            dimension_semantics=("parallel", "arbitrary"),
            vmem_limit_bytes=_vmem_limit(p1_step_bytes)),
    )(high_lr, low, w1h_t, w1l_t, w2t)

    # ---- Pass 2: gate folded into 1x1-conv weight, conv + bias + ReLU ------
    p2_step_bytes = (c_high + c_low + c_out) * tile * itemsize
    out_flat = pl.pallas_call(
        functools.partial(_conv_kernel, c_high=c_high),
        grid=(B, n_hw),
        in_specs=[
            pl.BlockSpec((1, 1, c_in), lambda b, t: (b, 0, 0)),
            pl.BlockSpec((1, c_high, tile), lambda b, t: (b, 0, t)),
            pl.BlockSpec((1, c_low, tile), lambda b, t: (b, 0, t)),
            pl.BlockSpec((c_out, c_high), lambda b, t: (0, 0)),
            pl.BlockSpec((c_out, c_low), lambda b, t: (0, 0)),
            pl.BlockSpec((c_out, 1), lambda b, t: (0, 0)),
        ],
        out_specs=pl.BlockSpec((1, c_out, tile), lambda b, t: (b, 0, t)),
        out_shape=jax.ShapeDtypeStruct((B, c_out, hw_pad), feat_dtype),
        compiler_params=pltpu.CompilerParams(
            dimension_semantics=("parallel", "parallel"),
            vmem_limit_bytes=_vmem_limit(p2_step_bytes)),
    )(gate, high_up, low, wch, wcl, bias)

    if hw_pad != hw:
        out_flat = out_flat[:, :, :hw]
    return out_flat.reshape(B, c_out, H2, W2)


def _reference_forward(high_features, low_features_list, params):
    # Pure-JAX reference of the PyTorch semantics, for a sanity check.
    feats = [_upsample_nearest_2x(high_features)] + list(low_features_list)
    feats = jnp.concatenate(feats, axis=1)
    y = jnp.mean(feats, axis=(2, 3))                               # (B, C)
    y = jnp.maximum(y @ params["fc1_w"].T, 0.0)
    y = jax.nn.sigmoid(y @ params["fc2_w"].T)
    feats = feats * y[:, :, None, None]
    wc = params["conv_w"][:, :, 0, 0]                              # (Cout, C)
    out = jnp.einsum("bchw,oc->bohw", feats, wc) + params["conv_b"][None, :, None, None]
    return jnp.maximum(out, 0.0)


if __name__ == "__main__":
    key = jax.random.PRNGKey(0)

    def make_case(case_key, B, c_high, c_low, H, W):
        k_hi, k_lo, k_w1, k_w2, k_wc, k_bc = jax.random.split(case_key, 6)
        c_in = c_high + c_low
        hidden = max(1, c_in // 16)       # reduction = 16
        c_out = c_high
        high = jax.random.normal(k_hi, (B, c_high, H, W), dtype=jnp.float32)
        low = jax.random.normal(k_lo, (B, c_low, 2 * H, 2 * W), dtype=jnp.float32)
        params = {
            "fc1_w": jax.random.normal(k_w1, (hidden, c_in), jnp.float32) * 0.1,
            "fc2_w": jax.random.normal(k_w2, (c_in, hidden), jnp.float32) * 0.1,
            "conv_w": jax.random.normal(k_wc, (c_out, c_in, 1, 1), jnp.float32) * 0.1,
            "conv_b": jax.random.normal(k_bc, (c_out,), jnp.float32) * 0.1,
        }
        return high, low, params

    k1, k2, k3 = jax.random.split(key, 3)

    # Case 1: module defaults (16 high + 48 low channels), 8x8 high -> 16x16 out.
    high, low, params = make_case(k1, B=2, c_high=16, c_low=48, H=8, W=8)
    ref = _reference_forward(high, [low], params)
    out = jax.block_until_ready(fse_module_forward(high, [low], params))
    assert out.shape == ref.shape
    assert jnp.allclose(out, ref, atol=1e-4, rtol=1e-4)

    # Case 2: 16x16 high -> 32x32 out, forced hw_tile=512 to exercise the
    # multi-tile pooled reduction and the tiled conv path.
    high, low, params = make_case(k2, B=2, c_high=16, c_low=48, H=16, W=16)
    ref = _reference_forward(high, [low], params)
    out = jax.block_until_ready(
        fse_module_forward(high, [low], params, hw_tile=512))
    assert jnp.allclose(out, ref, atol=1e-4, rtol=1e-4)

    # Case 3: non-lane-aligned spatial extent (6x10 high -> 12x20 out):
    # single full-extent block path.
    high, low, params = make_case(k3, B=2, c_high=16, c_low=48, H=6, W=10)
    ref = _reference_forward(high, [low], params)
    out = jax.block_until_ready(fse_module_forward(high, [low], params))
    assert jnp.allclose(out, ref, atol=1e-4, rtol=1e-4)

    print("KERNEL_OK")
</pallas_src>

<mosaic_0001>
module attributes {stable_mosaic.version = 11 : i64} {
  func.func @_gate_kernel(%arg0: i32, %arg1: i32, %arg2: memref<1x16x64xf32, #tpu.memory_space<vmem>>, %arg3: memref<1x48x256xf32, #tpu.memory_space<vmem>>, %arg4: memref<16x4xf32, #tpu.memory_space<vmem>>, %arg5: memref<48x4xf32, #tpu.memory_space<vmem>>, %arg6: memref<4x64xf32, #tpu.memory_space<vmem>>, %arg7: memref<1x1x64xf32, #tpu.memory_space<vmem>>, %arg8: memref<16x1xf32, #tpu.memory_space<vmem>>, %arg9: memref<48x1xf32, #tpu.memory_space<vmem>>) attributes {dimension_semantics = [#tpu.dimension_semantics<parallel>, #tpu.dimension_semantics<arbitrary>], iteration_bounds = array<i64: 2, 1>, scalar_prefetch = 0 : i64, scratch_operands = 2 : i64, tpu.core_type = #tpu.core_type<tc>, window_params = [{transform_indices = @transform_0, window_bounds = array<i64: 1, 16, 64>}, {transform_indices = @transform_1, window_bounds = array<i64: 1, 48, 256>}, {pipeline_mode = #tpu.pipeline_mode<synchronous>, transform_indices = @transform_2, window_bounds = array<i64: 16, 4>}, {pipeline_mode = #tpu.pipeline_mode<synchronous>, transform_indices = @transform_3, window_bounds = array<i64: 48, 4>}, {pipeline_mode = #tpu.pipeline_mode<synchronous>, transform_indices = @transform_4, window_bounds = array<i64: 4, 64>}, {transform_indices = @transform_5, window_bounds = array<i64: 1, 1, 64>}]} {
    %c0_i32 = arith.constant 0 : i32
    %0 = arith.cmpi eq, %arg1, %c0_i32 : i32
    %1 = arith.extui %0 : i1 to i32
    %c0_i32_0 = arith.constant 0 : i32
    %2 = arith.cmpi ne, %1, %c0_i32_0 : i32
    scf.if %2 {
      %cst_17 = arith.constant 0.000000e+00 : f32
      %20 = vector.broadcast %cst_17 : f32 to vector<16x1xf32>
      %c0_18 = arith.constant 0 : index
      %c0_19 = arith.constant 0 : index
      %21 = vector.load %arg8[%c0_18, %c0_19] : memref<16x1xf32, #tpu.memory_space<vmem>>, vector<16x1xf32>
      tpu.vector_store %arg8[%c0_18, %c0_19], %20 {strides = array<i32>} : memref<16x1xf32, #tpu.memory_space<vmem>>, vector<16x1xf32>,
      %cst_20 = arith.constant 0.000000e+00 : f32
      %22 = vector.broadcast %cst_20 : f32 to vector<48x1xf32>
      %c0_21 = arith.constant 0 : index
      %c0_22 = arith.constant 0 : index
      %23 = vector.load %arg9[%c0_21, %c0_22] : memref<48x1xf32, #tpu.memory_space<vmem>>, vector<48x1xf32>
      tpu.vector_store %arg9[%c0_21, %c0_22], %22 {strides = array<i32>} : memref<48x1xf32, #tpu.memory_space<vmem>>, vector<48x1xf32>,
    } else {
    }
    %c0 = arith.constant 0 : index
    %c0_1 = arith.constant 0 : index
    %3 = vector.load %arg8[%c0, %c0_1] : memref<16x1xf32, #tpu.memory_space<vmem>>, vector<16x1xf32>
    %c0_2 = arith.constant 0 : index
    %c0_3 = arith.constant 0 : index
    %c0_4 = arith.constant 0 : index
    %4 = vector.load %arg2[%c0_2, %c0_3, %c0_4] : memref<1x16x64xf32, #tpu.memory_space<vmem>>, vector<1x16x64xf32>
    %5 = vector.shape_cast %4 : vector<1x16x64xf32> to vector<16x64xf32>
    %cst = arith.constant dense<0.000000e+00> : vector<16xf32>
    %6 = vector.multi_reduction <add>, %5, %cst [1] : vector<16x64xf32> to vector<16xf32>
    %7 = vector.shape_cast %6 : vector<16xf32> to vector<16x1xf32>
    %8 = arith.addf %3, %7 : vector<16x1xf32>
    %c0_5 = arith.constant 0 : index
    %c0_6 = arith.constant 0 : index
    %9 = vector.load %arg8[%c0_5, %c0_6] : memref<16x1xf32, #tpu.memory_space<vmem>>, vector<16x1xf32>
    tpu.vector_store %arg8[%c0_5, %c0_6], %8 {strides = array<i32>} : memref<16x1xf32, #tpu.memory_space<vmem>>, vector<16x1xf32>,
    %c0_7 = arith.constant 0 : index
    %c0_8 = arith.constant 0 : index
    %10 = vector.load %arg9[%c0_7, %c0_8] : memref<48x1xf32, #tpu.memory_space<vmem>>, vector<48x1xf32>
    %c0_9 = arith.constant 0 : index
    %c0_10 = arith.constant 0 : index
    %c0_11 = arith.constant 0 : index
    %11 = vector.load %arg3[%c0_9, %c0_10, %c0_11] : memref<1x48x256xf32, #tpu.memory_space<vmem>>, vector<1x48x256xf32>
    %12 = vector.shape_cast %11 : vector<1x48x256xf32> to vector<48x256xf32>
    %cst_12 = arith.constant dense<0.000000e+00> : vector<48xf32>
    %13 = vector.multi_reduction <add>, %12, %cst_12 [1] : vector<48x256xf32> to vector<48xf32>
    %14 = vector.shape_cast %13 : vector<48xf32> to vector<48x1xf32>
    %15 = arith.addf %10, %14 : vector<48x1xf32>
    %c0_13 = arith.constant 0 : index
    %c0_14 = arith.constant 0 : index
    %16 = vector.load %arg9[%c0_13, %c0_14] : memref<48x1xf32, #tpu.memory_space<vmem>>, vector<48x1xf32>
    tpu.vector_store %arg9[%c0_13, %c0_14], %15 {strides = array<i32>} : memref<48x1xf32, #tpu.memory_space<vmem>>, vector<48x1xf32>,
    %c0_i32_15 = arith.constant 0 : i32
    %17 = arith.cmpi eq, %arg1, %c0_i32_15 : i32
    %18 = arith.extui %17 : i1 to i32
    %c0_i32_16 = arith.constant 0 : i32
    %19 = arith.cmpi ne, %18, %c0_i32_16 : i32
    scf.if %19 {
      %c0_17 = arith.constant 0 : index
      %c0_18 = arith.constant 0 : index
      %20 = vector.load %arg8[%c0_17, %c0_18] : memref<16x1xf32, #tpu.memory_space<vmem>>, vector<16x1xf32>
      %cst_19 = arith.constant 1.562500e-02 : f32
      %21 = vector.broadcast %cst_19 : f32 to vector<16x1xf32>
      %22 = arith.mulf %20, %21 : vector<16x1xf32>
      %c0_20 = arith.constant 0 : index
      %c0_21 = arith.constant 0 : index
      %23 = vector.load %arg9[%c0_20, %c0_21] : memref<48x1xf32, #tpu.memory_space<vmem>>, vector<48x1xf32>
      %cst_22 = arith.constant 3.906250e-03 : f32
      %24 = vector.broadcast %cst_22 : f32 to vector<48x1xf32>
      %25 = arith.mulf %23, %24 : vector<48x1xf32>
      %c0_23 = arith.constant 0 : index
      %c0_24 = arith.constant 0 : index
      %26 = vector.load %arg4[%c0_23, %c0_24] : memref<16x4xf32, #tpu.memory_space<vmem>>, vector<16x4xf32>
      %27 = vector.broadcast %22 : vector<16x1xf32> to vector<16x4xf32>
      %28 = arith.mulf %26, %27 : vector<16x4xf32>
      %cst_25 = arith.constant dense<0.000000e+00> : vector<4xf32>
      %29 = vector.multi_reduction <add>, %28, %cst_25 [0] : vector<16x4xf32> to vector<4xf32>
      %30 = vector.shape_cast %29 : vector<4xf32> to vector<1x4xf32>
      %c0_26 = arith.constant 0 : index
      %c0_27 = arith.constant 0 : index
      %31 = vector.load %arg5[%c0_26, %c0_27] : memref<48x4xf32, #tpu.memory_space<vmem>>, vector<48x4xf32>
      %32 = vector.broadcast %25 : vector<48x1xf32> to vector<48x4xf32>
      %33 = arith.mulf %31, %32 : vector<48x4xf32>
      %cst_28 = arith.constant dense<0.000000e+00> : vector<4xf32>
      %34 = vector.multi_reduction <add>, %33, %cst_28 [0] : vector<48x4xf32> to vector<4xf32>
      %35 = vector.shape_cast %34 : vector<4xf32> to vector<1x4xf32>
      %36 = arith.addf %30, %35 : vector<1x4xf32>
      %cst_29 = arith.constant 0.000000e+00 : f32
      %37 = vector.broadcast %cst_29 : f32 to vector<1x4xf32>
      %38 = arith.maximumf %36, %37 : vector<1x4xf32>
      %c0_30 = arith.constant 0 : index
      %c0_31 = arith.constant 0 : index
      %39 = vector.load %arg6[%c0_30, %c0_31] : memref<4x64xf32, #tpu.memory_space<vmem>>, vector<4x64xf32>
      %cst_32 = arith.constant dense<0.000000e+00> : vector<1x64xf32>
      %40 = tpu.matmul %38, %39, %cst_32 {dimension_numbers = #tpu.dot_dimension_numbers<[1], [0], [0], [1], [0, 0, 1, 1], [], []>} : vector<1x4xf32>, vector<4x64xf32>, vector<1x64xf32> -> vector<1x64xf32>
      %41 = arith.negf %40 : vector<1x64xf32>
      %42 = math.exp %41 : vector<1x64xf32>
      %cst_33 = arith.constant 1.000000e+00 : f32
      %43 = vector.broadcast %cst_33 : f32 to vector<1x64xf32>
      %44 = arith.addf %43, %42 : vector<1x64xf32>
      %45 = arith.divf %43, %44 : vector<1x64xf32>
      %c0_34 = arith.constant 0 : index
      %c0_35 = arith.constant 0 : index
      %c0_36 = arith.constant 0 : index
      %46 = vector.load %arg7[%c0_34, %c0_35, %c0_36] : memref<1x1x64xf32, #tpu.memory_space<vmem>>, vector<1x1x64xf32>
      %47 = vector.shape_cast %46 : vector<1x1x64xf32> to vector<1x64xf32>
      %48 = vector.shape_cast %45 : vector<1x64xf32> to vector<1x1x64xf32>
      tpu.vector_store %arg7[%c0_34, %c0_35, %c0_36], %48 {strides = array<i32>} : memref<1x1x64xf32, #tpu.memory_space<vmem>>, vector<1x1x64xf32>,
    } else {
    }
    return
  }
  func.func @transform_0(%arg0: i32, %arg1: i32) -> (i32, i32, i32) {
    %c0_i32 = arith.constant 0 : i32
    %c0_i32_0 = arith.constant 0 : i32
    return %arg0, %c0_i32, %arg1 : i32, i32, i32
  }
  func.func @transform_1(%arg0: i32, %arg1: i32) -> (i32, i32, i32) {
    %c0_i32 = arith.constant 0 : i32
    %c0_i32_0 = arith.constant 0 : i32
    return %arg0, %c0_i32, %arg1 : i32, i32, i32
  }
  func.func @transform_2(%arg0: i32, %arg1: i32) -> (i32, i32) {
    %c0_i32 = arith.constant 0 : i32
    %c0_i32_0 = arith.constant 0 : i32
    %c0_i32_1 = arith.constant 0 : i32
    return %c0_i32, %c0_i32_0 : i32, i32
  }
  func.func @transform_3(%arg0: i32, %arg1: i32) -> (i32, i32) {
    %c0_i32 = arith.constant 0 : i32
    %c0_i32_0 = arith.constant 0 : i32
    %c0_i32_1 = arith.constant 0 : i32
    return %c0_i32, %c0_i32_0 : i32, i32
  }
  func.func @transform_4(%arg0: i32, %arg1: i32) -> (i32, i32) {
    %c0_i32 = arith.constant 0 : i32
    %c0_i32_0 = arith.constant 0 : i32
    %c0_i32_1 = arith.constant 0 : i32
    return %c0_i32, %c0_i32_0 : i32, i32
  }
  func.func @transform_5(%arg0: i32, %arg1: i32) -> (i32, i32, i32) {
    %c0_i32 = arith.constant 0 : i32
    %c0_i32_0 = arith.constant 0 : i32
    %c0_i32_1 = arith.constant 0 : i32
    return %arg0, %c0_i32, %c0_i32_0 : i32, i32, i32
  }
}

module attributes {stable_mosaic.version = 11 : i64} {
  func.func @_conv_kernel(%arg0: i32, %arg1: i32, %arg2: memref<1x1x64xf32, #tpu.memory_space<vmem>>, %arg3: memref<1x16x256xf32, #tpu.memory_space<vmem>>, %arg4: memref<1x48x256xf32, #tpu.memory_space<vmem>>, %arg5: memref<16x16xf32, #tpu.memory_space<vmem>>, %arg6: memref<16x48xf32, #tpu.memory_space<vmem>>, %arg7: memref<16x1xf32, #tpu.memory_space<vmem>>, %arg8: memref<1x16x256xf32, #tpu.memory_space<vmem>>) attributes {dimension_semantics = [#tpu.dimension_semantics<parallel>, #tpu.dimension_semantics<parallel>], iteration_bounds = array<i64: 2, 1>, scalar_prefetch = 0 : i64, scratch_operands = 0 : i64, tpu.core_type = #tpu.core_type<tc>, window_params = [{transform_indices = @transform_0, window_bounds = array<i64: 1, 1, 64>}, {transform_indices = @transform_1, window_bounds = array<i64: 1, 16, 256>}, {transform_indices = @transform_2, window_bounds = array<i64: 1, 48, 256>}, {pipeline_mode = #tpu.pipeline_mode<synchronous>, transform_indices = @transform_3, window_bounds = array<i64: 16, 16>}, {pipeline_mode = #tpu.pipeline_mode<synchronous>, transform_indices = @transform_4, window_bounds = array<i64: 16, 48>}, {pipeline_mode = #tpu.pipeline_mode<synchronous>, transform_indices = @transform_5, window_bounds = array<i64: 16, 1>}, {transform_indices = @transform_6, window_bounds = array<i64: 1, 16, 256>}]} {
    %c0 = arith.constant 0 : index
    %c0_0 = arith.constant 0 : index
    %c0_1 = arith.constant 0 : index
    %0 = vector.load %arg2[%c0, %c0_0, %c0_1] : memref<1x1x64xf32, #tpu.memory_space<vmem>>, vector<1x1x16xf32>
    %1 = vector.shape_cast %0 : vector<1x1x16xf32> to vector<1x16xf32>
    %c0_2 = arith.constant 0 : index
    %c0_3 = arith.constant 0 : index
    %c16 = arith.constant 16 : index
    %2 = vector.load %arg2[%c0_2, %c0_3, %c16] : memref<1x1x64xf32, #tpu.memory_space<vmem>>, vector<1x1x48xf32>
    %3 = vector.shape_cast %2 : vector<1x1x48xf32> to vector<1x48xf32>
    %c0_4 = arith.constant 0 : index
    %c0_5 = arith.constant 0 : index
    %4 = vector.load %arg5[%c0_4, %c0_5] : memref<16x16xf32, #tpu.memory_space<vmem>>, vector<16x16xf32>
    %5 = vector.broadcast %1 : vector<1x16xf32> to vector<16x16xf32>
    %6 = arith.mulf %4, %5 : vector<16x16xf32>
    %c0_6 = arith.constant 0 : index
    %c0_7 = arith.constant 0 : index
    %7 = vector.load %arg6[%c0_6, %c0_7] : memref<16x48xf32, #tpu.memory_space<vmem>>, vector<16x48xf32>
    %8 = vector.broadcast %3 : vector<1x48xf32> to vector<16x48xf32>
    %9 = arith.mulf %7, %8 : vector<16x48xf32>
    %c0_8 = arith.constant 0 : index
    %c0_9 = arith.constant 0 : index
    %c0_10 = arith.constant 0 : index
    %10 = vector.load %arg3[%c0_8, %c0_9, %c0_10] : memref<1x16x256xf32, #tpu.memory_space<vmem>>, vector<1x16x256xf32>
    %11 = vector.shape_cast %10 : vector<1x16x256xf32> to vector<16x256xf32>
    %cst = arith.constant dense<0.000000e+00> : vector<16x256xf32>
    %12 = tpu.matmul %6, %11, %cst {dimension_numbers = #tpu.dot_dimension_numbers<[1], [0], [0], [1], [0, 0, 1, 1], [], []>} : vector<16x16xf32>, vector<16x256xf32>, vector<16x256xf32> -> vector<16x256xf32>
    %c0_11 = arith.constant 0 : index
    %c0_12 = arith.constant 0 : index
    %c0_13 = arith.constant 0 : index
    %13 = vector.load %arg4[%c0_11, %c0_12, %c0_13] : memref<1x48x256xf32, #tpu.memory_space<vmem>>, vector<1x48x256xf32>
    %14 = vector.shape_cast %13 : vector<1x48x256xf32> to vector<48x256xf32>
    %cst_14 = arith.constant dense<0.000000e+00> : vector<16x256xf32>
    %15 = tpu.matmul %9, %14, %cst_14 {dimension_numbers = #tpu.dot_dimension_numbers<[1], [0], [0], [1], [0, 0, 1, 1], [], []>} : vector<16x48xf32>, vector<48x256xf32>, vector<16x256xf32> -> vector<16x256xf32>
    %16 = arith.addf %12, %15 : vector<16x256xf32>
    %c0_15 = arith.constant 0 : index
    %c0_16 = arith.constant 0 : index
    %17 = vector.load %arg7[%c0_15, %c0_16] : memref<16x1xf32, #tpu.memory_space<vmem>>, vector<16x1xf32>
    %18 = vector.broadcast %17 : vector<16x1xf32> to vector<16x256xf32>
    %19 = arith.addf %16, %18 : vector<16x256xf32>
    %cst_17 = arith.constant 0.000000e+00 : f32
    %20 = vector.broadcast %cst_17 : f32 to vector<16x256xf32>
    %21 = arith.maximumf %19, %20 : vector<16x256xf32>
    %c0_18 = arith.constant 0 : index
    %c0_19 = arith.constant 0 : index
    %c0_20 = arith.constant 0 : index
    %22 = vector.load %arg8[%c0_18, %c0_19, %c0_20] : memref<1x16x256xf32, #tpu.memory_space<vmem>>, vector<1x16x256xf32>
    %23 = vector.shape_cast %22 : vector<1x16x256xf32> to vector<16x256xf32>
    %24 = vector.shape_cast %21 : vector<16x256xf32> to vector<1x16x256xf32>
    tpu.vector_store %arg8[%c0_18, %c0_19, %c0_20], %24 {strides = array<i32>} : memref<1x16x256xf32, #tpu.memory_space<vmem>>, vector<1x16x256xf32>,
    return
  }
  func.func @transform_0(%arg0: i32, %arg1: i32) -> (i32, i32, i32) {
    %c0_i32 = arith.constant 0 : i32
    %c0_i32_0 = arith.constant 0 : i32
    %c0_i32_1 = arith.constant 0 : i32
    return %arg0, %c0_i32, %c0_i32_0 : i32, i32, i32
  }
  func.func @transform_1(%arg0: i32, %arg1: i32) -> (i32, i32, i32) {
    %c0_i32 = arith.constant 0 : i32
    %c0_i32_0 = arith.constant 0 : i32
    return %arg0, %c0_i32, %arg1 : i32, i32, i32
  }
  func.func @transform_2(%arg0: i32, %arg1: i32) -> (i32, i32, i32) {
    %c0_i32 = arith.constant 0 : i32
    %c0_i32_0 = arith.constant 0 : i32
    return %arg0, %c0_i32, %arg1 : i32, i32, i32
  }
  func.func @transform_3(%arg0: i32, %arg1: i32) -> (i32, i32) {
    %c0_i32 = arith.constant 0 : i32
    %c0_i32_0 = arith.constant 0 : i32
    %c0_i32_1 = arith.constant 0 : i32
    return %c0_i32, %c0_i32_0 : i32, i32
  }
  func.func @transform_4(%arg0: i32, %arg1: i32) -> (i32, i32) {
    %c0_i32 = arith.constant 0 : i32
    %c0_i32_0 = arith.constant 0 : i32
    %c0_i32_1 = arith.constant 0 : i32
    return %c0_i32, %c0_i32_0 : i32, i32
  }
  func.func @transform_5(%arg0: i32, %arg1: i32) -> (i32, i32) {
    %c0_i32 = arith.constant 0 : i32
    %c0_i32_0 = arith.constant 0 : i32
    %c0_i32_1 = arith.constant 0 : i32
    return %c0_i32, %c0_i32_0 : i32, i32
  }
  func.func @transform_6(%arg0: i32, %arg1: i32) -> (i32, i32, i32) {
    %c0_i32 = arith.constant 0 : i32
    %c0_i32_0 = arith.constant 0 : i32
    return %arg0, %c0_i32, %arg1 : i32, i32, i32
  }
}

</mosaic_0001>

<llo_original>
// kernel: fse_module_forward.2
$region0: #{fse_module_forward.2}
  #allocation0 [shape = 'u32[]', space=smem, size = 0x4, offset = 0x4, fixed_abs, tag = 'smem constant byte address 0x4 - core index']
  #allocation1 [shape = 'u32[144,128]{1,0:T(1,128)}', space=vmem, size = 0x12000, scoped, tag = 'internal scratch']
  #allocation2 [shape = 'f32[16,1]{1,0:T(8,128)}', space=vmem, size = 0x2000, scoped, tag = 'scratch operand']
  #allocation3 [shape = 'f32[48,1]{1,0:T(8,128)}', space=vmem, size = 0x6000, scoped, tag = 'scratch operand']
  %s0 = inlined_call_operand.vmem [shape: f32[2,16,64], index: 0, kind: input, shape index: {}]
  %s1 = inlined_call_operand.vmem [shape: f32[2,48,256], index: 1, kind: input, shape index: {}]
  %s2 = inlined_call_operand.vmem [shape: f32[16,4], index: 2, kind: input, shape index: {}]
  %s3 = inlined_call_operand.vmem [shape: f32[48,4], index: 3, kind: input, shape index: {}]
  %s4 = inlined_call_operand.vmem [shape: f32[4,64], index: 4, kind: input, shape index: {}]
  %s5 = inlined_call_operand.vmem [shape: f32[2,1,64], index: 5, kind: output, shape index: {}]
  %s6 = sld [smem:[#allocation0]]
  $region61: #{fse_module_forward.2} parent=0
    _
  %s8 = ssub.s32 1, %s6
  %s9 = scalar_select 0, %s8, %s6
  loop: start=0, step=1, limit=4
  $region2: #{fse_module_forward.2} parent=0 // loop_pre_header
    _
  $region3: #{fse_module_forward.2} parent=0 // loop_header
    %s11 = sphi 0, %s15
    %p12 = scmp.ge.s32.totalorder %s11, 4
    %s18 = sphi 0, %s30
    %s19 = sphi 0, %s26
    %s20 = sphi 0, %s18
    %s21 = sphi 0, %s19
    %s22 = sphi 0, %s20
    %s23 = sphi 0, %s21
    %s35 = sphi 0, %s37
    %s38 = sphi 0, %s35
    %s39 = sphi 0, %s38
    %s55 = sphi 0, %s39
    %s63 = sphi 0, %s65
    %s66 = sphi 0, %s63
    %s67 = sphi 0, %s66
    %s83 = sphi 0, %s67
    %s87 = sphi 0, %s87
    %s89 = sphi 0, %s87
    %s90 = sphi 0, %s89
    %s104 = sphi 0, %s90
    %s108 = sphi 0, %s108
    %s110 = sphi 0, %s108
    %s111 = sphi 0, %s110
    %s125 = sphi 0, %s111
    %s129 = sphi 0, %s129
    %s131 = sphi 0, %s129
    %s132 = sphi 0, %s131
    %s146 = sphi 0, %s132
    %s152 = sphi 0, %s154
    %s155 = sphi 0, %s152
    %s156 = sphi 0, %s155
    %s172 = sphi 0, %s156
  $region4: #{fse_module_forward.2} parent=0 // loop_header_branch
    %14 = sbr.rel (%p12) target = $region8
  $region5: #{fse_module_forward.2} parent=0 // loop_body
    %s16 = ssub.s32 %s11, 1
    %s17 = ssub.s32 %s11, 2
    %s24 = sadd.s32 1, %s19
    %p25 = scmp.ge.s32.totalorder %s24, 1
    %s26 = scalar_select %p25, 0, %s24
    %s27 = sadd.s32 1, %s18
    %s28 = scalar_select %p25, %s27, %s18
    %p29 = scmp.ge.s32.totalorder %s28, 2
    %s30 = scalar_select %p29, 0, %s28
    %s31 = ssub.s32 %s18, %s30
    %s32 = ssub.s32 %s19, %s26
    %s33 = sor.u32 %s31, %s32
    %p34 = scmp.eq.s32.totalorder %s33, 0
    %s36 = sadd.s32 %s35, 1
    %s37 = scalar_select %p34, %s35, %s36
    %p40 = pneg %p34
    %p41 = scmp.eq.s32.totalorder %s11, 1
    %p42 = por %p40, %p41
    %p43 = scmp.ne.s32.totalorder %s35, %s38
    %p44 = scmp.eq.s32.totalorder %s11, 0
    %p45 = por %p43, %p44
    %p46 = scmp.ne.s32.totalorder %s35, %s38
    %p47 = scmp.eq.s32.totalorder %s16, 1
    %p48 = por %p46, %p47
    %p49 = scmp.ne.s32.totalorder %s38, %s39
    %p50 = scmp.eq.s32.totalorder %s16, 0
    %p51 = por %p49, %p50
    %p52 = scmp.ne.s32.totalorder %s38, %s39
    %p53 = scmp.eq.s32.totalorder %s17, 1
    %p54 = por %p52, %p53
    %p56 = scmp.ne.s32.totalorder %s39, %s55
    %p57 = scmp.eq.s32.totalorder %s17, 0
    %p58 = por %p56, %p57
    %s59 = ssub.s32 %s18, %s30
    %s60 = ssub.s32 %s19, %s26
    %s61 = sor.u32 %s59, %s60
    %p62 = scmp.eq.s32.totalorder %s61, 0
    %s64 = sadd.s32 %s63, 1
    %s65 = scalar_select %p62, %s63, %s64
    %p68 = pneg %p62
    %p69 = scmp.eq.s32.totalorder %s11, 1
    %p70 = por %p68, %p69
    %p71 = scmp.ne.s32.totalorder %s63, %s66
    %p72 = scmp.eq.s32.totalorder %s11, 0
    %p73 = por %p71, %p72
    %p74 = scmp.ne.s32.totalorder %s63, %s66
    %p75 = scmp.eq.s32.totalorder %s16, 1
    %p76 = por %p74, %p75
    %p77 = scmp.ne.s32.totalorder %s66, %s67
    %p78 = scmp.eq.s32.totalorder %s16, 0
    %p79 = por %p77, %p78
    %p80 = scmp.ne.s32.totalorder %s66, %s67
    %p81 = scmp.eq.s32.totalorder %s17, 1
    %p82 = por %p80, %p81
    %p84 = scmp.ne.s32.totalorder %s67, %s83
    %p85 = scmp.eq.s32.totalorder %s17, 0
    %p86 = por %p84, %p85
    %s88 = sadd.s32 %s87, 1
    %p91 = scmp.eq.s32.totalorder %s11, 1
    %p92 = scmp.ne.s32.totalorder %s87, %s89
    %p93 = scmp.eq.s32.totalorder %s11, 0
    %p94 = por %p92, %p93
    %p95 = scmp.ne.s32.totalorder %s87, %s89
    %p96 = scmp.eq.s32.totalorder %s16, 1
    %p97 = por %p95, %p96
    %p98 = scmp.ne.s32.totalorder %s89, %s90
    %p99 = scmp.eq.s32.totalorder %s16, 0
    %p100 = por %p98, %p99
    %p101 = scmp.ne.s32.totalorder %s89, %s90
    %p102 = scmp.eq.s32.totalorder %s17, 1
    %p103 = por %p101, %p102
    %p105 = scmp.ne.s32.totalorder %s90, %s104
    %p106 = scmp.eq.s32.totalorder %s17, 0
    %p107 = por %p105, %p106
    %s109 = sadd.s32 %s108, 1
    %p112 = scmp.eq.s32.totalorder %s11, 1
    %p113 = scmp.ne.s32.totalorder %s108, %s110
    %p114 = scmp.eq.s32.totalorder %s11, 0
    %p115 = por %p113, %p114
    %p116 = scmp.ne.s32.totalorder %s108, %s110
    %p117 = scmp.eq.s32.totalorder %s16, 1
    %p118 = por %p116, %p117
    %p119 = scmp.ne.s32.totalorder %s110, %s111
    %p120 = scmp.eq.s32.totalorder %s16, 0
    %p121 = por %p119, %p120
    %p122 = scmp.ne.s32.totalorder %s110, %s111
    %p123 = scmp.eq.s32.totalorder %s17, 1
    %p124 = por %p122, %p123
    %p126 = scmp.ne.s32.totalorder %s111, %s125
    %p127 = scmp.eq.s32.totalorder %s17, 0
    %p128 = por %p126, %p127
    %s130 = sadd.s32 %s129, 1
    %p133 = scmp.eq.s32.totalorder %s11, 1
    %p134 = scmp.ne.s32.totalorder %s129, %s131
    %p135 = scmp.eq.s32.totalorder %s11, 0
    %p136 = por %p134, %p135
    %p137 = scmp.ne.s32.totalorder %s129, %s131
    %p138 = scmp.eq.s32.totalorder %s16, 1
    %p139 = por %p137, %p138
    %p140 = scmp.ne.s32.totalorder %s131, %s132
    %p141 = scmp.eq.s32.totalorder %s16, 0
    %p142 = por %p140, %p141
    %p143 = scmp.ne.s32.totalorder %s131, %s132
    %p144 = scmp.eq.s32.totalorder %s17, 1
    %p145 = por %p143, %p144
    %p147 = scmp.ne.s32.totalorder %s132, %s146
    %p148 = scmp.eq.s32.totalorder %s17, 0
    %p149 = por %p147, %p148
    %s150 = ssub.s32 %s18, %s30
    %p151 = scmp.eq.s32.totalorder %s150, 0
    %s153 = sadd.s32 %s152, 1
    %s154 = scalar_select %p151, %s152, %s153
    %p157 = pneg %p151
    %p158 = scmp.eq.s32.totalorder %s11, 1
    %p159 = por %p157, %p158
    %p160 = scmp.ne.s32.totalorder %s152, %s155
    %p161 = scmp.eq.s32.totalorder %s11, 0
    %p162 = por %p160, %p161
    %p163 = scmp.ne.s32.totalorder %s152, %s155
    %p164 = scmp.eq.s32.totalorder %s16, 1
    %p165 = por %p163, %p164
    %p166 = scmp.ne.s32.totalorder %s155, %s156
    %p167 = scmp.eq.s32.totalorder %s16, 0
    %p168 = por %p166, %p167
    %p169 = scmp.ne.s32.totalorder %s155, %s156
    %p170 = scmp.eq.s32.totalorder %s17, 1
    %p171 = por %p169, %p170
    %p173 = scmp.ne.s32.totalorder %s156, %s172
    %p174 = scmp.eq.s32.totalorder %s17, 0
    %p175 = por %p173, %p174
    %p176 = scmp.le.s32.totalorder 1, %s11
    %p177 = scmp.lt.s32.totalorder %s11, 3
    %p178 = pnand %p176, %p177
    %p179 = pneg %p178
    // Predicated region
    $region9: #{fse_module_forward.2} parent=5 // pred_check
      _
    $region10: #{fse_module_forward.2} parent=5 // pred_check_branch
      %181 = sbr.rel (%p178) target = $region12
    $region11: #{fse_module_forward.2} parent=5 // pred_region
      %s182 = ssub.s32 %s11, 1
      // Predicated region
      $region13: #{fse_module_forward.2} parent=11 // pred_check
        %p183 = pneg %p100
      $region14: #{fse_module_forward.2} parent=11 // pred_check_branch
        %185 = sbr.rel (%p183) target = $region16
      $region15: #{fse_module_forward.2} parent=11 // pred_region
        _
      $region16: #{fse_module_forward.2} parent=11 // pred_fallthru
        _
      // Predicated region
      $region17: #{fse_module_forward.2} parent=11 // pred_check
        %p186 = pneg %p121
      $region18: #{fse_module_forward.2} parent=11 // pred_check_branch
        %188 = sbr.rel (%p186) target = $region20
      $region19: #{fse_module_forward.2} parent=11 // pred_region
        _
      $region20: #{fse_module_forward.2} parent=11 // pred_fallthru
        _
      // Predicated region
      $region21: #{fse_module_forward.2} parent=11 // pred_check
        %p189 = pneg %p142
      $region22: #{fse_module_forward.2} parent=11 // pred_check_branch
        %191 = sbr.rel (%p189) target = $region24
      $region23: #{fse_module_forward.2} parent=11 // pred_region
        _
      $region24: #{fse_module_forward.2} parent=11 // pred_fallthru
        _
    $region12: #{fse_module_forward.2} parent=5 // pred_fallthru
      _
    %p192 = scmp.lt.s32.totalorder %s11, 2
    // Predicated region
    $region25: #{fse_module_forward.2} parent=5 // pred_check
      %p193 = pneg %p192
    $region26: #{fse_module_forward.2} parent=5 // pred_check_branch
      %195 = sbr.rel (%p193) target = $region28
    $region27: #{fse_module_forward.2} parent=5 // pred_region
      // Predicated region
      $region29: #{fse_module_forward.2} parent=27 // pred_check
        %p196 = pneg %p45
      $region30: #{fse_module_forward.2} parent=27 // pred_check_branch
        %198 = sbr.rel (%p196) target = $region32
      $region31: #{fse_module_forward.2} parent=27 // pred_region
        %p199 = scmp.lt.s32.totalorder %s18, 1
        %s200 = scalar_select %p199, %s18, 1
        %p201 = scmp.lt.s32.totalorder %s19, 0
        %s202 = scalar_select %p201, %s19, 0
        %s203 = smul.addr %s200, 2
        %s204 = sadd.s32 %s202, %s203
        %s205 = smul.addr %s204, 8
        %s206 = scalar_lea.vmem %s0, %s205
      $region32: #{fse_module_forward.2} parent=27 // pred_fallthru
        _
      // Predicated region
      $region33: #{fse_module_forward.2} parent=27 // pred_check
        %p207 = pneg %p73
      $region34: #{fse_module_forward.2} parent=27 // pred_check_branch
        %209 = sbr.rel (%p207) target = $region36
      $region35: #{fse_module_forward.2} parent=27 // pred_region
        %s210 = smul.u32 2, %s19
        %p211 = scmp.lt.s32.totalorder %s18, 1
        %s212 = scalar_select %p211, %s18, 1
        %p213 = scmp.lt.s32.totalorder %s210, 1
        %s214 = scalar_select %p213, %s210, 1
        %s215 = smul.addr %s212, 12
        %s216 = sadd.s32 %s214, %s215
        %s217 = smul.addr %s216, 8
        %s218 = scalar_lea.vmem %s1, %s217
        %s219 = smul.u32 2, %s19
      $region36: #{fse_module_forward.2} parent=27 // pred_fallthru
        _
    $region28: #{fse_module_forward.2} parent=5 // pred_fallthru
      _
    %p220 = scmp.le.s32.totalorder 1, %s11
    %p221 = scmp.lt.s32.totalorder %s11, 3
    %p222 = pnand %p220, %p221
    %p223 = pneg %p222
    // Predicated region
    $region37: #{fse_module_forward.2} parent=5 // pred_check
      _
    $region38: #{fse_module_forward.2} parent=5 // pred_check_branch
      %225 = sbr.rel (%p222) target = $region40
    $region39: #{fse_module_forward.2} parent=5 // pred_region
      %s226 = ssub.s32 %s11, 1
      %p227 = scmp.lt.s32.totalorder %s20, 1
      %s228 = scalar_select %p227, %s20, 1
      %p229 = scmp.lt.s32.totalorder %s21, 0
      %s230 = scalar_select %p229, %s21, 0
      %s231 = smul.addr %s228, 2
      %s232 = sadd.s32 %s230, %s231
      %s233 = smul.addr %s232, 8
      %s234 = scalar_lea.vmem %s0, %s233
      %p235 = pneg %p51
      %p236 = pneg %p48
      %s237 = smul.u32 2, %s21
      %p238 = scmp.lt.s32.totalorder %s20, 1
      %s239 = scalar_select %p238, %s20, 1
      %p240 = scmp.lt.s32.totalorder %s237, 1
      %s241 = scalar_select %p240, %s237, 1
      %s242 = smul.addr %s239, 12
      %s243 = sadd.s32 %s241, %s242
      %s244 = smul.addr %s243, 8
      %s245 = scalar_lea.vmem %s1, %s244
      %p246 = pneg %p79
      %p247 = pneg %p76
      %p248 = pneg %p100
      %p249 = pneg %p97
      %p250 = pneg %p121
      %p251 = pneg %p118
      %p252 = pneg %p142
      %p253 = pneg %p139
      %p254 = pneg %p168
      %p255 = pneg %p165
      %p256 = scmp.lt.s32.totalorder %s20, 1
      %s257 = scalar_select %p256, %s20, 1
      %s258 = scalar_lea.vmem %s5, %s257
      %p259 = scmp.lt.s32.totalorder %s20, 1
      %s260 = scalar_select %p259, %s20, 1
      %p261 = scmp.lt.s32.totalorder %s21, 0
      %s262 = scalar_select %p261, %s21, 0
      %s263 = smul.addr %s260, 2
      %s264 = sadd.s32 %s262, %s263
      %s265 = smul.addr %s264, 8
      %s266 = scalar_lea.vmem %s0, %s265
      %s267 = smul.u32 2, %s21
      %p268 = scmp.lt.s32.totalorder %s20, 1
      %s269 = scalar_select %p268, %s20, 1
      %p270 = scmp.lt.s32.totalorder %s267, 1
      %s271 = scalar_select %p270, %s267, 1
      %s272 = smul.addr %s269, 12
      %s273 = sadd.s32 %s271, %s272
      %s274 = smul.addr %s273, 8
      %s275 = scalar_lea.vmem %s1, %s274
      %s276 = smul.u32 2, %s21
      %p277 = scmp.lt.s32.totalorder %s20, 1
      %s278 = scalar_select %p277, %s20, 1
      %s279 = scalar_lea.vmem %s5, %s278
      %p280 = scmp.eq.s32.totalorder %s21, 0
      // Predicated region
      $region41: #{fse_module_forward.2} parent=39 // pred_check
        %p281 = pneg %p280
      $region42: #{fse_module_forward.2} parent=39 // pred_check_branch
        %283 = sbr.rel (%p281) target = $region44
      $region43: #{fse_module_forward.2} parent=39 // pred_region
        %vm284 = vcmask 7168
        %285 = vst.msk [vmem:[#allocation2] sm:$0xff] %vm284, 0.0
        %286 = vst.msk [vmem:[#allocation2 + $0x8] sm:$0xff] %vm284, 0.0
        %287 = vst.msk [vmem:[#allocation3] sm:$0xff] %vm284, 0.0
        %288 = vst.msk [vmem:[#allocation3 + $0x8] sm:$0xff] %vm284, 0.0
        %289 = vst.msk [vmem:[#allocation3 + $0x10] sm:$0xff] %vm284, 0.0
        %290 = vst.msk [vmem:[#allocation3 + $0x18] sm:$0xff] %vm284, 0.0
        %291 = vst.msk [vmem:[#allocation3 + $0x20] sm:$0xff] %vm284, 0.0
        %292 = vst.msk [vmem:[#allocation3 + $0x28] sm:$0xff] %vm284, 0.0
      $region44: #{fse_module_forward.2} parent=39 // pred_fallthru
        _
      %v293 = vld [vmem:[#allocation2] sm:$0xff]
      %v294 = vld [vmem:[#allocation2 + $0x8] sm:$0xff]
      %v295 = vld [vmem:[%s266] sm:$0xff]
      %v296 = vld [vmem:[%s266 + $0x8] sm:$0xff]
      %vm297 = vcmask 523264
      %v298 = vsel %vm297, %v295, 0.0
      %299 = vadd.xlane.f32.xlu0 %v298
      %v300 = vpop.xlane.xlu0 %299
      %v301 = vsel %vm297, %v296, 0.0
      %302 = vadd.xlane.f32.xlu0 %v301
      %v303 = vpop.xlane.xlu0 %302
      %v304 = vadd.f32 %v293, %v300
      %v305 = vadd.f32 %v294, %v303
      %vm306 = vcmask 7168
      %307 = vst.msk [vmem:[#allocation2] sm:$0xff] %vm306, %v304
      %308 = vst.msk [vmem:[#allocation2 + $0x8] sm:$0xff] %vm306, %v305
      %v309 = vld [vmem:[#allocation3] sm:$0xff]
      %v310 = vld [vmem:[#allocation3 + $0x8] sm:$0xff]
      %v311 = vld [vmem:[#allocation3 + $0x10] sm:$0xff]
      %v312 = vld [vmem:[#allocation3 + $0x18] sm:$0xff]
      %v313 = vld [vmem:[#allocation3 + $0x20] sm:$0xff]
      %v314 = vld [vmem:[#allocation3 + $0x28] sm:$0xff]
      %v315 = vld [vmem:[%s275] sm:$0xff]
      %v316 = vld [vmem:[%s275 + $0x8] sm:$0xff]
      %v317 = vld [vmem:[%s275 + $0x10] sm:$0xff]
      %v318 = vld [vmem:[%s275 + $0x18] sm:$0xff]
      %v319 = vld [vmem:[%s275 + $0x20] sm:$0xff]
      %v320 = vld [vmem:[%s275 + $0x28] sm:$0xff]
      %v321 = vld [vmem:[%s275 + $0x30] sm:$0xff]
      %v322 = vld [vmem:[%s275 + $0x38] sm:$0xff]
      %v323 = vld [vmem:[%s275 + $0x40] sm:$0xff]
      %v324 = vld [vmem:[%s275 + $0x48] sm:$0xff]
      %v325 = vld [vmem:[%s275 + $0x50] sm:$0xff]
      %v326 = vld [vmem:[%s275 + $0x58] sm:$0xff]
      %v327 = vadd.f32 %v315, %v316
      %328 = vadd.xlane.f32.xlu0 %v327
      %v329 = vpop.xlane.xlu0 %328
      %v330 = vadd.f32 %v317, %v318
      %331 = vadd.xlane.f32.xlu0 %v330
      %v332 = vpop.xlane.xlu0 %331
      %v333 = vadd.f32 %v319, %v320
      %334 = vadd.xlane.f32.xlu0 %v333
      %v335 = vpop.xlane.xlu0 %334
      %v336 = vadd.f32 %v321, %v322
      %337 = vadd.xlane.f32.xlu0 %v336
      %v338 = vpop.xlane.xlu0 %337
      %v339 = vadd.f32 %v323, %v324
      %340 = vadd.xlane.f32.xlu0 %v339
      %v341 = vpop.xlane.xlu0 %340
      %v342 = vadd.f32 %v325, %v326
      %343 = vadd.xlane.f32.xlu0 %v342
      %v344 = vpop.xlane.xlu0 %343
      %v345 = vadd.f32 %v309, %v329
      %v346 = vadd.f32 %v310, %v332
      %v347 = vadd.f32 %v311, %v335
      %v348 = vadd.f32 %v312, %v338
      %v349 = vadd.f32 %v313, %v341
      %v350 = vadd.f32 %v314, %v344
      %351 = vst.msk [vmem:[#allocation3] sm:$0xff] %vm306, %v345
      %352 = vst.msk [vmem:[#allocation3 + $0x8] sm:$0xff] %vm306, %v346
      %353 = vst.msk [vmem:[#allocation3 + $0x10] sm:$0xff] %vm306, %v347
      %354 = vst.msk [vmem:[#allocation3 + $0x18] sm:$0xff] %vm306, %v348
      %355 = vst.msk [vmem:[#allocation3 + $0x20] sm:$0xff] %vm306, %v349
      %356 = vst.msk [vmem:[#allocation3 + $0x28] sm:$0xff] %vm306, %v350
      // Predicated region
      $region45: #{fse_module_forward.2} parent=39 // pred_check
        %p357 = pneg %p280
      $region46: #{fse_module_forward.2} parent=39 // pred_check_branch
        %359 = sbr.rel (%p357) target = $region48
      $region47: #{fse_module_forward.2} parent=39 // pred_region
        %v360 = vld [vmem:[#allocation2] sm:$0xff]
        %v361 = vld [vmem:[#allocation2 + $0x8] sm:$0xff]
        %v362 = vmul.f32 %v360, 0.015625
        %v363 = vmul.f32 %v361, 0.015625
        %v364 = vld [vmem:[#allocation3] sm:$0xff]
        %v365 = vld [vmem:[#allocation3 + $0x8] sm:$0xff]
        %v366 = vld [vmem:[#allocation3 + $0x10] sm:$0xff]
        %v367 = vld [vmem:[#allocation3 + $0x18] sm:$0xff]
        %v368 = vld [vmem:[#allocation3 + $0x20] sm:$0xff]
        %v369 = vld [vmem:[#allocation3 + $0x28] sm:$0xff]
        %v370 = vmul.f32 %v364, 0.00390625
        %v371 = vmul.f32 %v365, 0.00390625
        %v372 = vmul.f32 %v366, 0.00390625
        %v373 = vmul.f32 %v367, 0.00390625
        %v374 = vmul.f32 %v368, 0.00390625
        %v375 = vmul.f32 %v369, 0.00390625
        %v376 = vld [vmem:[%s2] sm:$0xff]
        %v377 = vld [vmem:[%s2 + $0x8] sm:$0xff]
        %379 = vset.pattern.permute.xlu0 0
        %380 = vperm.xlu0 %379, %v362
        %v381 = vpop.permute.xlu0 %380
        %384 = vset.pattern.permute.xlu0 0
        %385 = vperm.xlu0 %384, %v363
        %v386 = vpop.permute.xlu0 %385
        %v388 = vmul.f32 %v376, %v381
        %v389 = vmul.f32 %v377, %v386
        %vm390 = vcmask 31744
        %v391 = vsel %vm390, %v388, 0.0
        %v392 = vsel %vm390, %v389, 0.0
        %v393 = vadd.f32 %v391, %v392
        %v394 = vrot.slane %v393, 4
        %v395 = vadd.f32 %v393, %v394
        %v396 = vrot.slane %v395, 2
        %v397 = vadd.f32 %v395, %v396
        %v398 = vrot.slane %v397, 1
        %v399 = vadd.f32 %v397, %v398
        %v400 = vld [vmem:[%s3] sm:$0xff]
        %v401 = vld [vmem:[%s3 + $0x8] sm:$0xff]
        %v402 = vld [vmem:[%s3 + $0x10] sm:$0xff]
        %v403 = vld [vmem:[%s3 + $0x18] sm:$0xff]
        %v404 = vld [vmem:[%s3 + $0x20] sm:$0xff]
        %v405 = vld [vmem:[%s3 + $0x28] sm:$0xff]
        %407 = vset.pattern.permute.xlu0 0
        %408 = vperm.xlu0 %407, %v370
        %v409 = vpop.permute.xlu0 %408
        %412 = vset.pattern.permute.xlu0 0
        %413 = vperm.xlu0 %412, %v371
        %v414 = vpop.permute.xlu0 %413
        %417 = vset.pattern.permute.xlu0 0
        %418 = vperm.xlu0 %417, %v372
        %v419 = vpop.permute.xlu0 %418
        %422 = vset.pattern.permute.xlu0 0
        %423 = vperm.xlu0 %422, %v373
        %v424 = vpop.permute.xlu0 %423
        %427 = vset.pattern.permute.xlu0 0
        %428 = vperm.xlu0 %427, %v374
        %v429 = vpop.permute.xlu0 %428
        %432 = vset.pattern.permute.xlu0 0
        %433 = vperm.xlu0 %432, %v375
        %v434 = vpop.permute.xlu0 %433
        %v436 = vmul.f32 %v400, %v409
        %v437 = vmul.f32 %v401, %v414
        %v438 = vmul.f32 %v402, %v419
        %v439 = vmul.f32 %v403, %v424
        %v440 = vmul.f32 %v404, %v429
        %v441 = vmul.f32 %v405, %v434
        %v442 = vsel %vm390, %v436, 0.0
        %v443 = vsel %vm390, %v437, 0.0
        %v444 = vadd.f32 %v442, %v443
        %v445 = vsel %vm390, %v438, 0.0
        %v446 = vadd.f32 %v444, %v445
        %v447 = vsel %vm390, %v439, 0.0
        %v448 = vadd.f32 %v446, %v447
        %v449 = vsel %vm390, %v440, 0.0
        %v450 = vadd.f32 %v448, %v449
        %v451 = vsel %vm390, %v441, 0.0
        %v452 = vadd.f32 %v450, %v451
        %v453 = vrot.slane %v452, 4
        %v454 = vadd.f32 %v452, %v453
        %v455 = vrot.slane %v454, 2
        %v456 = vadd.f32 %v454, %v455
        %v457 = vrot.slane %v456, 1
        %v458 = vadd.f32 %v456, %v457
        %v459 = vadd.f32 %v399, %v458
        %v460 = vmax.f32 %v459, 0.0
        %v461 = vld [vmem:[%s4] sm:$0xf]
        %v463 = vsel %vm390, %v460, 0
        %vm465 = vcmask 1043456
        %v467 = vsel %vm465, %v461, 0
        %469 = vmatprep.subr.mxu0 0.0
        %470 = vmatpush1.msra.mxu0 %v467
        %471 = vmatprep.subr.mxu0 0.0
        %472 = vmatpush1.msra.mxu0 0.0
        %473 = vmatprep.subr.mxu0 0.0
        %474 = vmatpush1.msra.mxu0 0.0
        %475 = vmatprep.subr.mxu0 0.0
        %476 = vmatpush1.msra.mxu0 0.0
        %477 = vmatprep.subr.mxu0 0.0
        %478 = vmatpush1.msra.mxu0 0.0
        %479 = vmatprep.subr.mxu0 0.0
        %480 = vmatpush1.msra.mxu0 0.0
        %481 = vmatprep.subr.mxu0 0.0
        %482 = vmatpush1.msra.mxu0 0.0
        %483 = vmatprep.subr.mxu0 0.0
        %484 = vmatpush1.msra.mxu0 0.0
        %485 = vmatprep.subr.mxu0 0.0
        %486 = vmatpush1.msra.mxu0 0.0
        %487 = vmatprep.subr.mxu0 0.0
        %488 = vmatpush1.msra.mxu0 0.0
        %489 = vmatprep.subr.mxu0 0.0
        %490 = vmatpush1.msra.mxu0 0.0
        %491 = vmatprep.subr.mxu0 0.0
        %492 = vmatpush1.msra.mxu0 0.0
        %493 = vmatprep.subr.mxu0 0.0
        %494 = vmatpush1.msra.mxu0 0.0
        %495 = vmatprep.subr.mxu0 0.0
        %496 = vmatpush1.msra.mxu0 0.0
        %497 = vmatprep.subr.mxu0 0.0
        %498 = vmatpush1.msra.mxu0 0.0
        %499 = vmatprep.subr.mxu0 0.0
        %500 = vmatpush1.msra.mxu0 0.0
        %501 = vmatprep.subr.mxu0 0.0
        %502 = vmatpush1.msra.mxu0 0.0
        %503 = vmatprep.subr.mxu0 0.0
        %504 = vmatpush1.msra.mxu0 0.0
        %505 = vmatprep.subr.mxu0 0.0
        %506 = vmatpush1.msra.mxu0 0.0
        %507 = vmatprep.subr.mxu0 0.0
        %508 = vmatpush1.msra.mxu0 0.0
        %509 = vmatprep.subr.mxu0 0.0
        %510 = vmatpush1.msra.mxu0 0.0
        %511 = vmatprep.subr.mxu0 0.0
        %512 = vmatpush1.msra.mxu0 0.0
        %513 = vmatprep.subr.mxu0 0.0
        %514 = vmatpush1.msra.mxu0 0.0
        %515 = vmatprep.subr.mxu0 0.0
        %516 = vmatpush1.msra.mxu0 0.0
        %517 = vmatprep.subr.mxu0 0.0
        %518 = vmatpush1.msra.mxu0 0.0
        %519 = vmatprep.subr.mxu0 0.0
        %520 = vmatpush1.msra.mxu0 0.0
        %521 = vmatprep.subr.mxu0 0.0
        %522 = vmatpush1.msra.mxu0 0.0
        %523 = vmatprep.subr.mxu0 0.0
        %524 = vmatpush1.msra.mxu0 0.0
        %525 = vmatprep.subr.mxu0 0.0
        %526 = vmatpush1.msra.mxu0 0.0
        %527 = vmatprep.subr.mxu0 0.0
        %528 = vmatpush1.msra.mxu0 0.0
        %529 = vmatprep.subr.mxu0 0.0
        %530 = vmatpush1.msra.mxu0 0.0
        %531 = vmatprep.subr.mxu0 0.0
        %532 = vmatpush1.msra.mxu0 0.0
        %533 = vmatprep.mubr.f32.mxu0 0.0
        %534 = vmatmul.mubr.f32.gmra.mrb[0].mxu0 %v463
        %v535 = vpop.f32.mrb[0].mxu0
        %v536 = vadd.f32 0.0, %v535
        %v537 = vpop.f32.mrb[0].mxu0
        %538 = vdwg.mxu0
        %v539 = vxor.u32 %v536, 2147483648
        %v540 = vmul.f32 %v539, 1.442695
        %v541 = vpow.pop %v540
        %v542 = vadd.f32 %v541, 1.0
        %v543 = vrcp.pop %v542
        %v544 = vmul.f32 1.0, %v543
        %vm545 = vcmask 516096
        %546 = vst.msk [vmem:[%s279] sm:$0x1] %vm545, %v544
      $region48: #{fse_module_forward.2} parent=39 // pred_fallthru
        _
      %p547 = scmp.lt.s32.totalorder %s20, 1
      %s548 = scalar_select %p547, %s20, 1
      %s549 = scalar_lea.vmem %s5, %s548
      // Predicated region
      $region49: #{fse_module_forward.2} parent=39 // pred_check
        %p550 = pneg %p165
      $region50: #{fse_module_forward.2} parent=39 // pred_check_branch
        %552 = sbr.rel (%p550) target = $region52
      $region51: #{fse_module_forward.2} parent=39 // pred_region
        _
      $region52: #{fse_module_forward.2} parent=39 // pred_fallthru
        _
    $region40: #{fse_module_forward.2} parent=5 // pred_fallthru
      _
    %p553 = scmp.le.s32.totalorder 2, %s11
    // Predicated region
    $region53: #{fse_module_forward.2} parent=5 // pred_check
      %p554 = pneg %p553
    $region54: #{fse_module_forward.2} parent=5 // pred_check_branch
      %556 = sbr.rel (%p554) target = $region56
    $region55: #{fse_module_forward.2} parent=5 // pred_region
      %s557 = ssub.s32 %s11, 2
      // Predicated region
      $region57: #{fse_module_forward.2} parent=55 // pred_check
        %p558 = pneg %p171
      $region58: #{fse_module_forward.2} parent=55 // pred_check_branch
        %560 = sbr.rel (%p558) target = $region60
      $region59: #{fse_module_forward.2} parent=55 // pred_region
        %p561 = scmp.lt.s32.totalorder %s22, 1
        %s562 = scalar_select %p561, %s22, 1
        %s563 = scalar_lea.vmem %s5, %s562
      $region60: #{fse_module_forward.2} parent=55 // pred_fallthru
        _
    $region56: #{fse_module_forward.2} parent=5 // pred_fallthru
      _
  $region6: #{fse_module_forward.2} parent=0 // loop_footer
    %s15 = sadd.s32 1, %s11
  $region7: #{fse_module_forward.2} parent=0 // loop_footer_branch
    %10 = sbr.rel target = $region3
  $region8: #{fse_module_forward.2} parent=0 // loop_exit
    _

// kernel: fse_module_forward.3
$region0: #{fse_module_forward.3}
  #allocation0 [shape = 'u32[]', space=smem, size = 0x4, offset = 0x4, fixed_abs, tag = 'smem constant byte address 0x4 - core index']
  #allocation1 [shape = 'u32[144,128]{1,0:T(1,128)}', space=vmem, size = 0x12000, scoped, tag = 'internal scratch']
  %s0 = inlined_call_operand.vmem [shape: f32[2,1,64], index: 0, kind: input, shape index: {}]
  %s1 = inlined_call_operand.vmem [shape: f32[2,16,256], index: 1, kind: input, shape index: {}]
  %s2 = inlined_call_operand.vmem [shape: f32[2,48,256], index: 2, kind: input, shape index: {}]
  %s3 = inlined_call_operand.vmem [shape: f32[16,16], index: 3, kind: input, shape index: {}]
  %s4 = inlined_call_operand.vmem [shape: f32[16,48], index: 4, kind: input, shape index: {}]
  %s5 = inlined_call_operand.vmem [shape: f32[16,1], index: 5, kind: input, shape index: {}]
  %s6 = inlined_call_operand.vmem [shape: f32[2,16,256], index: 6, kind: output, shape index: {}]
  %s7 = sld [smem:[#allocation0]]
  $region57: #{fse_module_forward.3} parent=0
    _
  %s9 = ssub.s32 1, %s7
  %s10 = scalar_select 0, %s9, %s7
  loop: start=0, step=1, limit=4
  $region2: #{fse_module_forward.3} parent=0 // loop_pre_header
    _
  $region3: #{fse_module_forward.3} parent=0 // loop_header
    %s12 = sphi 0, %s16
    %p13 = scmp.ge.s32.totalorder %s12, 4
    %s19 = sphi 0, %s31
    %s20 = sphi 0, %s27
    %s21 = sphi 0, %s19
    %s22 = sphi 0, %s20
    %s23 = sphi 0, %s21
    %s24 = sphi 0, %s22
    %s34 = sphi 0, %s36
    %s37 = sphi 0, %s34
    %s38 = sphi 0, %s37
    %s54 = sphi 0, %s38
    %s62 = sphi 0, %s64
    %s65 = sphi 0, %s62
    %s66 = sphi 0, %s65
    %s82 = sphi 0, %s66
    %s90 = sphi 0, %s92
    %s93 = sphi 0, %s90
    %s94 = sphi 0, %s93
    %s110 = sphi 0, %s94
    %s114 = sphi 0, %s114
    %s116 = sphi 0, %s114
    %s117 = sphi 0, %s116
    %s131 = sphi 0, %s117
    %s135 = sphi 0, %s135
    %s137 = sphi 0, %s135
    %s138 = sphi 0, %s137
    %s152 = sphi 0, %s138
    %s156 = sphi 0, %s156
    %s158 = sphi 0, %s156
    %s159 = sphi 0, %s158
    %s173 = sphi 0, %s159
    %s181 = sphi 0, %s183
    %s184 = sphi 0, %s181
    %s185 = sphi 0, %s184
    %s201 = sphi 0, %s185
  $region4: #{fse_module_forward.3} parent=0 // loop_header_branch
    %15 = sbr.rel (%p13) target = $region8
  $region5: #{fse_module_forward.3} parent=0 // loop_body
    %s17 = ssub.s32 %s12, 1
    %s18 = ssub.s32 %s12, 2
    %s25 = sadd.s32 1, %s20
    %p26 = scmp.ge.s32.totalorder %s25, 1
    %s27 = scalar_select %p26, 0, %s25
    %s28 = sadd.s32 1, %s19
    %s29 = scalar_select %p26, %s28, %s19
    %p30 = scmp.ge.s32.totalorder %s29, 2
    %s31 = scalar_select %p30, 0, %s29
    %s32 = ssub.s32 %s19, %s31
    %p33 = scmp.eq.s32.totalorder %s32, 0
    %s35 = sadd.s32 %s34, 1
    %s36 = scalar_select %p33, %s34, %s35
    %p39 = pneg %p33
    %p40 = scmp.eq.s32.totalorder %s12, 1
    %p41 = por %p39, %p40
    %p42 = scmp.ne.s32.totalorder %s34, %s37
    %p43 = scmp.eq.s32.totalorder %s12, 0
    %p44 = por %p42, %p43
    %p45 = scmp.ne.s32.totalorder %s34, %s37
    %p46 = scmp.eq.s32.totalorder %s17, 1
    %p47 = por %p45, %p46
    %p48 = scmp.ne.s32.totalorder %s37, %s38
    %p49 = scmp.eq.s32.totalorder %s17, 0
    %p50 = por %p48, %p49
    %p51 = scmp.ne.s32.totalorder %s37, %s38
    %p52 = scmp.eq.s32.totalorder %s18, 1
    %p53 = por %p51, %p52
    %p55 = scmp.ne.s32.totalorder %s38, %s54
    %p56 = scmp.eq.s32.totalorder %s18, 0
    %p57 = por %p55, %p56
    %s58 = ssub.s32 %s19, %s31
    %s59 = ssub.s32 %s20, %s27
    %s60 = sor.u32 %s58, %s59
    %p61 = scmp.eq.s32.totalorder %s60, 0
    %s63 = sadd.s32 %s62, 1
    %s64 = scalar_select %p61, %s62, %s63
    %p67 = pneg %p61
    %p68 = scmp.eq.s32.totalorder %s12, 1
    %p69 = por %p67, %p68
    %p70 = scmp.ne.s32.totalorder %s62, %s65
    %p71 = scmp.eq.s32.totalorder %s12, 0
    %p72 = por %p70, %p71
    %p73 = scmp.ne.s32.totalorder %s62, %s65
    %p74 = scmp.eq.s32.totalorder %s17, 1
    %p75 = por %p73, %p74
    %p76 = scmp.ne.s32.totalorder %s65, %s66
    %p77 = scmp.eq.s32.totalorder %s17, 0
    %p78 = por %p76, %p77
    %p79 = scmp.ne.s32.totalorder %s65, %s66
    %p80 = scmp.eq.s32.totalorder %s18, 1
    %p81 = por %p79, %p80
    %p83 = scmp.ne.s32.totalorder %s66, %s82
    %p84 = scmp.eq.s32.totalorder %s18, 0
    %p85 = por %p83, %p84
    %s86 = ssub.s32 %s19, %s31
    %s87 = ssub.s32 %s20, %s27
    %s88 = sor.u32 %s86, %s87
    %p89 = scmp.eq.s32.totalorder %s88, 0
    %s91 = sadd.s32 %s90, 1
    %s92 = scalar_select %p89, %s90, %s91
    %p95 = pneg %p89
    %p96 = scmp.eq.s32.totalorder %s12, 1
    %p97 = por %p95, %p96
    %p98 = scmp.ne.s32.totalorder %s90, %s93
    %p99 = scmp.eq.s32.totalorder %s12, 0
    %p100 = por %p98, %p99
    %p101 = scmp.ne.s32.totalorder %s90, %s93
    %p102 = scmp.eq.s32.totalorder %s17, 1
    %p103 = por %p101, %p102
    %p104 = scmp.ne.s32.totalorder %s93, %s94
    %p105 = scmp.eq.s32.totalorder %s17, 0
    %p106 = por %p104, %p105
    %p107 = scmp.ne.s32.totalorder %s93, %s94
    %p108 = scmp.eq.s32.totalorder %s18, 1
    %p109 = por %p107, %p108
    %p111 = scmp.ne.s32.totalorder %s94, %s110
    %p112 = scmp.eq.s32.totalorder %s18, 0
    %p113 = por %p111, %p112
    %s115 = sadd.s32 %s114, 1
    %p118 = scmp.eq.s32.totalorder %s12, 1
    %p119 = scmp.ne.s32.totalorder %s114, %s116
    %p120 = scmp.eq.s32.totalorder %s12, 0
    %p121 = por %p119, %p120
    %p122 = scmp.ne.s32.totalorder %s114, %s116
    %p123 = scmp.eq.s32.totalorder %s17, 1
    %p124 = por %p122, %p123
    %p125 = scmp.ne.s32.totalorder %s116, %s117
    %p126 = scmp.eq.s32.totalorder %s17, 0
    %p127 = por %p125, %p126
    %p128 = scmp.ne.s32.totalorder %s116, %s117
    %p129 = scmp.eq.s32.totalorder %s18, 1
    %p130 = por %p128, %p129
    %p132 = scmp.ne.s32.totalorder %s117, %s131
    %p133 = scmp.eq.s32.totalorder %s18, 0
    %p134 = por %p132, %p133
    %s136 = sadd.s32 %s135, 1
    %p139 = scmp.eq.s32.totalorder %s12, 1
    %p140 = scmp.ne.s32.totalorder %s135, %s137
    %p141 = scmp.eq.s32.totalorder %s12, 0
    %p142 = por %p140, %p141
    %p143 = scmp.ne.s32.totalorder %s135, %s137
    %p144 = scmp.eq.s32.totalorder %s17, 1
    %p145 = por %p143, %p144
    %p146 = scmp.ne.s32.totalorder %s137, %s138
    %p147 = scmp.eq.s32.totalorder %s17, 0
    %p148 = por %p146, %p147
    %p149 = scmp.ne.s32.totalorder %s137, %s138
    %p150 = scmp.eq.s32.totalorder %s18, 1
    %p151 = por %p149, %p150
    %p153 = scmp.ne.s32.totalorder %s138, %s152
    %p154 = scmp.eq.s32.totalorder %s18, 0
    %p155 = por %p153, %p154
    %s157 = sadd.s32 %s156, 1
    %p160 = scmp.eq.s32.totalorder %s12, 1
    %p161 = scmp.ne.s32.totalorder %s156, %s158
    %p162 = scmp.eq.s32.totalorder %s12, 0
    %p163 = por %p161, %p162
    %p164 = scmp.ne.s32.totalorder %s156, %s158
    %p165 = scmp.eq.s32.totalorder %s17, 1
    %p166 = por %p164, %p165
    %p167 = scmp.ne.s32.totalorder %s158, %s159
    %p168 = scmp.eq.s32.totalorder %s17, 0
    %p169 = por %p167, %p168
    %p170 = scmp.ne.s32.totalorder %s158, %s159
    %p171 = scmp.eq.s32.totalorder %s18, 1
    %p172 = por %p170, %p171
    %p174 = scmp.ne.s32.totalorder %s159, %s173
    %p175 = scmp.eq.s32.totalorder %s18, 0
    %p176 = por %p174, %p175
    %s177 = ssub.s32 %s19, %s31
    %s178 = ssub.s32 %s20, %s27
    %s179 = sor.u32 %s177, %s178
    %p180 = scmp.eq.s32.totalorder %s179, 0
    %s182 = sadd.s32 %s181, 1
    %s183 = scalar_select %p180, %s181, %s182
    %p186 = pneg %p180
    %p187 = scmp.eq.s32.totalorder %s12, 1
    %p188 = por %p186, %p187
    %p189 = scmp.ne.s32.totalorder %s181, %s184
    %p190 = scmp.eq.s32.totalorder %s12, 0
    %p191 = por %p189, %p190
    %p192 = scmp.ne.s32.totalorder %s181, %s184
    %p193 = scmp.eq.s32.totalorder %s17, 1
    %p194 = por %p192, %p193
    %p195 = scmp.ne.s32.totalorder %s184, %s185
    %p196 = scmp.eq.s32.totalorder %s17, 0
    %p197 = por %p195, %p196
    %p198 = scmp.ne.s32.totalorder %s184, %s185
    %p199 = scmp.eq.s32.totalorder %s18, 1
    %p200 = por %p198, %p199
    %p202 = scmp.ne.s32.totalorder %s185, %s201
    %p203 = scmp.eq.s32.totalorder %s18, 0
    %p204 = por %p202, %p203
    %p205 = scmp.le.s32.totalorder 1, %s12
    %p206 = scmp.lt.s32.totalorder %s12, 3
    %p207 = pnand %p205, %p206
    %p208 = pneg %p207
    // Predicated region
    $region9: #{fse_module_forward.3} parent=5 // pred_check
      _
    $region10: #{fse_module_forward.3} parent=5 // pred_check_branch
      %210 = sbr.rel (%p207) target = $region12
    $region11: #{fse_module_forward.3} parent=5 // pred_region
      %s211 = ssub.s32 %s12, 1
      // Predicated region
      $region13: #{fse_module_forward.3} parent=11 // pred_check
        %p212 = pneg %p127
      $region14: #{fse_module_forward.3} parent=11 // pred_check_branch
        %214 = sbr.rel (%p212) target = $region16
      $region15: #{fse_module_forward.3} parent=11 // pred_region
        _
      $region16: #{fse_module_forward.3} parent=11 // pred_fallthru
        _
      // Predicated region
      $region17: #{fse_module_forward.3} parent=11 // pred_check
        %p215 = pneg %p148
      $region18: #{fse_module_forward.3} parent=11 // pred_check_branch
        %217 = sbr.rel (%p215) target = $region20
      $region19: #{fse_module_forward.3} parent=11 // pred_region
        _
      $region20: #{fse_module_forward.3} parent=11 // pred_fallthru
        _
      // Predicated region
      $region21: #{fse_module_forward.3} parent=11 // pred_check
        %p218 = pneg %p169
      $region22: #{fse_module_forward.3} parent=11 // pred_check_branch
        %220 = sbr.rel (%p218) target = $region24
      $region23: #{fse_module_forward.3} parent=11 // pred_region
        _
      $region24: #{fse_module_forward.3} parent=11 // pred_fallthru
        _
    $region12: #{fse_module_forward.3} parent=5 // pred_fallthru
      _
    %p221 = scmp.lt.s32.totalorder %s12, 2
    // Predicated region
    $region25: #{fse_module_forward.3} parent=5 // pred_check
      %p222 = pneg %p221
    $region26: #{fse_module_forward.3} parent=5 // pred_check_branch
      %224 = sbr.rel (%p222) target = $region28
    $region27: #{fse_module_forward.3} parent=5 // pred_region
      // Predicated region
      $region29: #{fse_module_forward.3} parent=27 // pred_check
        %p225 = pneg %p44
      $region30: #{fse_module_forward.3} parent=27 // pred_check_branch
        %227 = sbr.rel (%p225) target = $region32
      $region31: #{fse_module_forward.3} parent=27 // pred_region
        %p228 = scmp.lt.s32.totalorder %s19, 1
        %s229 = scalar_select %p228, %s19, 1
        %s230 = scalar_lea.vmem %s0, %s229
      $region32: #{fse_module_forward.3} parent=27 // pred_fallthru
        _
      // Predicated region
      $region33: #{fse_module_forward.3} parent=27 // pred_check
        %p231 = pneg %p72
      $region34: #{fse_module_forward.3} parent=27 // pred_check_branch
        %233 = sbr.rel (%p231) target = $region36
      $region35: #{fse_module_forward.3} parent=27 // pred_region
        %s234 = smul.u32 2, %s20
        %p235 = scmp.lt.s32.totalorder %s19, 1
        %s236 = scalar_select %p235, %s19, 1
        %p237 = scmp.lt.s32.totalorder %s234, 1
        %s238 = scalar_select %p237, %s234, 1
        %s239 = smul.addr %s236, 4
        %s240 = sadd.s32 %s238, %s239
        %s241 = smul.addr %s240, 8
        %s242 = scalar_lea.vmem %s1, %s241
        %s243 = smul.u32 2, %s20
      $region36: #{fse_module_forward.3} parent=27 // pred_fallthru
        _
      // Predicated region
      $region37: #{fse_module_forward.3} parent=27 // pred_check
        %p244 = pneg %p100
      $region38: #{fse_module_forward.3} parent=27 // pred_check_branch
        %246 = sbr.rel (%p244) target = $region40
      $region39: #{fse_module_forward.3} parent=27 // pred_region
        %s247 = smul.u32 2, %s20
        %p248 = scmp.lt.s32.totalorder %s19, 1
        %s249 = scalar_select %p248, %s19, 1
        %p250 = scmp.lt.s32.totalorder %s247, 1
        %s251 = scalar_select %p250, %s247, 1
        %s252 = smul.addr %s249, 12
        %s253 = sadd.s32 %s251, %s252
        %s254 = smul.addr %s253, 8
        %s255 = scalar_lea.vmem %s2, %s254
        %s256 = smul.u32 2, %s20
      $region40: #{fse_module_forward.3} parent=27 // pred_fallthru
        _
    $region28: #{fse_module_forward.3} parent=5 // pred_fallthru
      _
    %p257 = scmp.le.s32.totalorder 1, %s12
    %p258 = scmp.lt.s32.totalorder %s12, 3
    %p259 = pnand %p257, %p258
    %p260 = pneg %p259
    // Predicated region
    $region41: #{fse_module_forward.3} parent=5 // pred_check
      _
    $region42: #{fse_module_forward.3} parent=5 // pred_check_branch
      %262 = sbr.rel (%p259) target = $region44
    $region43: #{fse_module_forward.3} parent=5 // pred_region
      %s263 = ssub.s32 %s12, 1
      %p264 = scmp.lt.s32.totalorder %s21, 1
      %s265 = scalar_select %p264, %s21, 1
      %s266 = scalar_lea.vmem %s0, %s265
      %p267 = pneg %p50
      %p268 = pneg %p47
      %s269 = smul.u32 2, %s22
      %p270 = scmp.lt.s32.totalorder %s21, 1
      %s271 = scalar_select %p270, %s21, 1
      %p272 = scmp.lt.s32.totalorder %s269, 1
      %s273 = scalar_select %p272, %s269, 1
      %s274 = smul.addr %s271, 4
      %s275 = sadd.s32 %s273, %s274
      %s276 = smul.addr %s275, 8
      %s277 = scalar_lea.vmem %s1, %s276
      %p278 = pneg %p78
      %p279 = pneg %p75
      %s280 = smul.u32 2, %s22
      %p281 = scmp.lt.s32.totalorder %s21, 1
      %s282 = scalar_select %p281, %s21, 1
      %p283 = scmp.lt.s32.totalorder %s280, 1
      %s284 = scalar_select %p283, %s280, 1
      %s285 = smul.addr %s282, 12
      %s286 = sadd.s32 %s284, %s285
      %s287 = smul.addr %s286, 8
      %s288 = scalar_lea.vmem %s2, %s287
      %p289 = pneg %p106
      %p290 = pneg %p103
      %p291 = pneg %p127
      %p292 = pneg %p124
      %p293 = pneg %p148
      %p294 = pneg %p145
      %p295 = pneg %p169
      %p296 = pneg %p166
      %p297 = pneg %p197
      %p298 = pneg %p194
      %s299 = smul.u32 2, %s22
      %p300 = scmp.lt.s32.totalorder %s21, 1
      %s301 = scalar_select %p300, %s21, 1
      %p302 = scmp.lt.s32.totalorder %s299, 1
      %s303 = scalar_select %p302, %s299, 1
      %s304 = smul.addr %s301, 4
      %s305 = sadd.s32 %s303, %s304
      %s306 = smul.addr %s305, 8
      %s307 = scalar_lea.vmem %s6, %s306
      %p308 = scmp.lt.s32.totalorder %s21, 1
      %s309 = scalar_select %p308, %s21, 1
      %s310 = scalar_lea.vmem %s0, %s309
      %s311 = smul.u32 2, %s22
      %p312 = scmp.lt.s32.totalorder %s21, 1
      %s313 = scalar_select %p312, %s21, 1
      %p314 = scmp.lt.s32.totalorder %s311, 1
      %s315 = scalar_select %p314, %s311, 1
      %s316 = smul.addr %s313, 4
      %s317 = sadd.s32 %s315, %s316
      %s318 = smul.addr %s317, 8
      %s319 = scalar_lea.vmem %s1, %s318
      %s320 = smul.u32 2, %s22
      %s321 = smul.u32 2, %s22
      %p322 = scmp.lt.s32.totalorder %s21, 1
      %s323 = scalar_select %p322, %s21, 1
      %p324 = scmp.lt.s32.totalorder %s321, 1
      %s325 = scalar_select %p324, %s321, 1
      %s326 = smul.addr %s323, 12
      %s327 = sadd.s32 %s325, %s326
      %s328 = smul.addr %s327, 8
      %s329 = scalar_lea.vmem %s2, %s328
      %s330 = smul.u32 2, %s22
      %s331 = smul.u32 2, %s22
      %p332 = scmp.lt.s32.totalorder %s21, 1
      %s333 = scalar_select %p332, %s21, 1
      %p334 = scmp.lt.s32.totalorder %s331, 1
      %s335 = scalar_select %p334, %s331, 1
      %s336 = smul.addr %s333, 4
      %s337 = sadd.s32 %s335, %s336
      %s338 = smul.addr %s337, 8
      %s339 = scalar_lea.vmem %s6, %s338
      %s340 = smul.u32 2, %s22
      %v341 = vld [vmem:[%s310] sm:$0x1]
      %v342 = vld [vmem:[%s3] sm:$0xff]
      %v343 = vld [vmem:[%s3 + $0x8] sm:$0xff]
      %v345 = vlaneseq
      %v346 = vshrl.u32 %v345, 7
      %v347 = vsub.s32 0, %v346
      %v348 = vrot.slane %v341, %v347
      %v350 = vmul.f32 %v342, %v348
      %v351 = vmul.f32 %v343, %v348
      %v352 = vld [vmem:[%s4] sm:$0xff]
      %v353 = vld [vmem:[%s4 + $0x8] sm:$0xff]
      %354 = vrot.lane.b32.xlu0 %v348, 112
      %v355 = vpop.permute.xlu0 %354
      %v357 = vmul.f32 %v352, %v355
      %v358 = vmul.f32 %v353, %v355
      %v359 = vld [vmem:[%s319] sm:$0xff]
      %v360 = vld [vmem:[%s319 + $0x8] sm:$0xff]
      %v361 = vld [vmem:[%s319 + $0x10] sm:$0xff]
      %v362 = vld [vmem:[%s319 + $0x18] sm:$0xff]
      %v363 = vld [vmem:[%s329] sm:$0xff]
      %v364 = vld [vmem:[%s329 + $0x8] sm:$0xff]
      %v365 = vld [vmem:[%s329 + $0x10] sm:$0xff]
      %v366 = vld [vmem:[%s329 + $0x18] sm:$0xff]
      %v367 = vld [vmem:[%s329 + $0x20] sm:$0xff]
      %v368 = vld [vmem:[%s329 + $0x28] sm:$0xff]
      %v369 = vld [vmem:[%s329 + $0x30] sm:$0xff]
      %v370 = vld [vmem:[%s329 + $0x38] sm:$0xff]
      %v371 = vld [vmem:[%s329 + $0x40] sm:$0xff]
      %v372 = vld [vmem:[%s329 + $0x48] sm:$0xff]
      %v373 = vld [vmem:[%s329 + $0x50] sm:$0xff]
      %v374 = vld [vmem:[%s329 + $0x58] sm:$0xff]
      %vm375 = vcmask 392192
      %v377 = vsel %vm375, %v357, 0
      %v380 = vsel %vm375, %v358, 0
      %382 = vmatprep.subr.mxu0 %v364
      %383 = vmatpush1.msra.mxu0 %v363
      %384 = vmatprep.subr.mxu0 %v366
      %385 = vmatpush1.msra.mxu0 %v365
      %386 = vmatprep.subr.mxu0 %v368
      %387 = vmatpush1.msra.mxu0 %v367
      %388 = vmatprep.subr.mxu0 %v370
      %389 = vmatpush1.msra.mxu0 %v369
      %390 = vmatprep.subr.mxu0 %v372
      %391 = vmatpush1.msra.mxu0 %v371
      %392 = vmatprep.subr.mxu0 %v374
      %393 = vmatpush1.msra.mxu0 %v373
      %394 = vmatprep.subr.mxu0 0.0
      %395 = vmatpush1.msra.mxu0 0.0
      %396 = vmatprep.subr.mxu0 0.0
      %397 = vmatpush1.msra.mxu0 0.0
      %398 = vmatprep.subr.mxu0 0.0
      %399 = vmatpush1.msra.mxu0 0.0
      %400 = vmatprep.subr.mxu0 0.0
      %401 = vmatpush1.msra.mxu0 0.0
      %402 = vmatprep.subr.mxu0 0.0
      %403 = vmatpush1.msra.mxu0 0.0
      %404 = vmatprep.subr.mxu0 0.0
      %405 = vmatpush1.msra.mxu0 0.0
      %406 = vmatprep.subr.mxu0 0.0
      %407 = vmatpush1.msra.mxu0 0.0
      %408 = vmatprep.subr.mxu0 0.0
      %409 = vmatpush1.msra.mxu0 0.0
      %410 = vmatprep.subr.mxu0 0.0
      %411 = vmatpush1.msra.mxu0 0.0
      %412 = vmatprep.subr.mxu0 0.0
      %413 = vmatpush1.msra.mxu0 0.0
      %414 = vmatprep.subr.mxu0 0.0
      %415 = vmatpush1.msra.mxu0 0.0
      %416 = vmatprep.subr.mxu0 0.0
      %417 = vmatpush1.msra.mxu0 0.0
      %418 = vmatprep.subr.mxu0 0.0
      %419 = vmatpush1.msra.mxu0 0.0
      %420 = vmatprep.subr.mxu0 0.0
      %421 = vmatpush1.msra.mxu0 0.0
      %422 = vmatprep.subr.mxu0 0.0
      %423 = vmatpush1.msra.mxu0 0.0
      %424 = vmatprep.subr.mxu0 0.0
      %425 = vmatpush1.msra.mxu0 0.0
      %426 = vmatprep.subr.mxu0 0.0
      %427 = vmatpush1.msra.mxu0 0.0
      %428 = vmatprep.subr.mxu0 0.0
      %429 = vmatpush1.msra.mxu0 0.0
      %430 = vmatprep.subr.mxu0 0.0
      %431 = vmatpush1.msra.mxu0 0.0
      %432 = vmatprep.subr.mxu0 0.0
      %433 = vmatpush1.msra.mxu0 0.0
      %434 = vmatprep.subr.mxu0 0.0
      %435 = vmatpush1.msra.mxu0 0.0
      %436 = vmatprep.subr.mxu0 0.0
      %437 = vmatpush1.msra.mxu0 0.0
      %438 = vmatprep.subr.mxu0 0.0
      %439 = vmatpush1.msra.mxu0 0.0
      %440 = vmatprep.subr.mxu0 0.0
      %441 = vmatpush1.msra.mxu0 0.0
      %442 = vmatprep.subr.mxu0 0.0
      %443 = vmatpush1.msra.mxu0 0.0
      %444 = vmatprep.subr.mxu0 0.0
      %445 = vmatpush1.msra.mxu0 0.0
      %446 = vmatprep.mubr.f32.mxu0 0.0
      %447 = vmatmul.mubr.f32.gmra.mrb[0].mxu0 %v377
      %v448 = vpop.f32.mrb[0].mxu0
      %v449 = vadd.f32 0.0, %v448
      %v450 = vpop.f32.mrb[0].mxu0
      %v451 = vadd.f32 0.0, %v450
      %452 = vmatprep.mubr.f32.mxu0 0.0
      %453 = vmatmul.mubr.f32.gmra.mrb[0].mxu0 %v380
      %v454 = vpop.f32.mrb[0].mxu0
      %v455 = vadd.f32 0.0, %v454
      %v456 = vpop.f32.mrb[0].mxu0
      %v457 = vadd.f32 0.0, %v456
      %458 = vdwg.mxu0
      %vm459 = vcmask 130048
      %v461 = vsel %vm459, %v350, 0
      %v464 = vsel %vm459, %v351, 0
      %466 = vmatprep.subr.mxu0 %v360
      %467 = vmatpush1.msra.mxu0 %v359
      %468 = vmatprep.subr.mxu0 %v362
      %469 = vmatpush1.msra.mxu0 %v361
      %470 = vmatprep.subr.mxu0 0.0
      %471 = vmatpush1.msra.mxu0 0.0
      %472 = vmatprep.subr.mxu0 0.0
      %473 = vmatpush1.msra.mxu0 0.0
      %474 = vmatprep.subr.mxu0 0.0
      %475 = vmatpush1.msra.mxu0 0.0
      %476 = vmatprep.subr.mxu0 0.0
      %477 = vmatpush1.msra.mxu0 0.0
      %478 = vmatprep.subr.mxu0 0.0
      %479 = vmatpush1.msra.mxu0 0.0
      %480 = vmatprep.subr.mxu0 0.0
      %481 = vmatpush1.msra.mxu0 0.0
      %482 = vmatprep.subr.mxu0 0.0
      %483 = vmatpush1.msra.mxu0 0.0
      %484 = vmatprep.subr.mxu0 0.0
      %485 = vmatpush1.msra.mxu0 0.0
      %486 = vmatprep.subr.mxu0 0.0
      %487 = vmatpush1.msra.mxu0 0.0
      %488 = vmatprep.subr.mxu0 0.0
      %489 = vmatpush1.msra.mxu0 0.0
      %490 = vmatprep.subr.mxu0 0.0
      %491 = vmatpush1.msra.mxu0 0.0
      %492 = vmatprep.subr.mxu0 0.0
      %493 = vmatpush1.msra.mxu0 0.0
      %494 = vmatprep.subr.mxu0 0.0
      %495 = vmatpush1.msra.mxu0 0.0
      %496 = vmatprep.subr.mxu0 0.0
      %497 = vmatpush1.msra.mxu0 0.0
      %498 = vmatprep.subr.mxu0 0.0
      %499 = vmatpush1.msra.mxu0 0.0
      %500 = vmatprep.subr.mxu0 0.0
      %501 = vmatpush1.msra.mxu0 0.0
      %502 = vmatprep.subr.mxu0 0.0
      %503 = vmatpush1.msra.mxu0 0.0
      %504 = vmatprep.subr.mxu0 0.0
      %505 = vmatpush1.msra.mxu0 0.0
      %506 = vmatprep.subr.mxu0 0.0
      %507 = vmatpush1.msra.mxu0 0.0
      %508 = vmatprep.subr.mxu0 0.0
      %509 = vmatpush1.msra.mxu0 0.0
      %510 = vmatprep.subr.mxu0 0.0
      %511 = vmatpush1.msra.mxu0 0.0
      %512 = vmatprep.subr.mxu0 0.0
      %513 = vmatpush1.msra.mxu0 0.0
      %514 = vmatprep.subr.mxu0 0.0
      %515 = vmatpush1.msra.mxu0 0.0
      %516 = vmatprep.subr.mxu0 0.0
      %517 = vmatpush1.msra.mxu0 0.0
      %518 = vmatprep.subr.mxu0 0.0
      %519 = vmatpush1.msra.mxu0 0.0
      %520 = vmatprep.subr.mxu0 0.0
      %521 = vmatpush1.msra.mxu0 0.0
      %522 = vmatprep.subr.mxu0 0.0
      %523 = vmatpush1.msra.mxu0 0.0
      %524 = vmatprep.subr.mxu0 0.0
      %525 = vmatpush1.msra.mxu0 0.0
      %526 = vmatprep.subr.mxu0 0.0
      %527 = vmatpush1.msra.mxu0 0.0
      %528 = vmatprep.subr.mxu0 0.0
      %529 = vmatpush1.msra.mxu0 0.0
      %530 = vmatprep.mubr.f32.mxu0 0.0
      %531 = vmatmul.mubr.f32.gmra.mrb[0].mxu0 %v461
      %v532 = vpop.f32.mrb[0].mxu0
      %v533 = vadd.f32 %v449, %v532
      %v534 = vpop.f32.mrb[0].mxu0
      %v535 = vadd.f32 %v451, %v534
      %536 = vmatprep.mubr.f32.mxu0 0.0
      %537 = vmatmul.mubr.f32.gmra.mrb[0].mxu0 %v464
      %v538 = vpop.f32.mrb[0].mxu0
      %v539 = vadd.f32 %v455, %v538
      %v540 = vpop.f32.mrb[0].mxu0
      %v541 = vadd.f32 %v457, %v540
      %542 = vdwg.mxu0
      %v543 = vld [vmem:[%s5] sm:$0xff]
      %v544 = vld [vmem:[%s5 + $0x8] sm:$0xff]
      %546 = vset.pattern.permute.xlu0 0
      %547 = vperm.xlu0 %546, %v543
      %v548 = vpop.permute.xlu0 %547
      %551 = vset.pattern.permute.xlu0 0
      %552 = vperm.xlu0 %551, %v544
      %v553 = vpop.permute.xlu0 %552
      %v555 = vadd.f32 %v533, %v548
      %v556 = vadd.f32 %v535, %v548
      %v557 = vadd.f32 %v539, %v553
      %v558 = vadd.f32 %v541, %v553
      %v559 = vmax.f32 %v555, 0.0
      %v560 = vmax.f32 %v556, 0.0
      %v561 = vmax.f32 %v557, 0.0
      %v562 = vmax.f32 %v558, 0.0
      %563 = vst [vmem:[%s339] sm:$0xff] %v559
      %564 = vst [vmem:[%s339 + $0x8] sm:$0xff] %v560
      %565 = vst [vmem:[%s339 + $0x10] sm:$0xff] %v561
      %566 = vst [vmem:[%s339 + $0x18] sm:$0xff] %v562
      %s567 = smul.u32 2, %s22
      %p568 = scmp.lt.s32.totalorder %s21, 1
      %s569 = scalar_select %p568, %s21, 1
      %p570 = scmp.lt.s32.totalorder %s567, 1
      %s571 = scalar_select %p570, %s567, 1
      %s572 = smul.addr %s569, 4
      %s573 = sadd.s32 %s571, %s572
      %s574 = smul.addr %s573, 8
      %s575 = scalar_lea.vmem %s6, %s574
      // Predicated region
      $region45: #{fse_module_forward.3} parent=43 // pred_check
        %p576 = pneg %p194
      $region46: #{fse_module_forward.3} parent=43 // pred_check_branch
        %578 = sbr.rel (%p576) target = $region48
      $region47: #{fse_module_forward.3} parent=43 // pred_region
        %s579 = smul.u32 2, %s22
      $region48: #{fse_module_forward.3} parent=43 // pred_fallthru
        _
    $region44: #{fse_module_forward.3} parent=5 // pred_fallthru
      _
    %p580 = scmp.le.s32.totalorder 2, %s12
    // Predicated region
    $region49: #{fse_module_forward.3} parent=5 // pred_check
      %p581 = pneg %p580
    $region50: #{fse_module_forward.3} parent=5 // pred_check_branch
      %583 = sbr.rel (%p581) target = $region52
    $region51: #{fse_module_forward.3} parent=5 // pred_region
      %s584 = ssub.s32 %s12, 2
      // Predicated region
      $region53: #{fse_module_forward.3} parent=51 // pred_check
        %p585 = pneg %p200
      $region54: #{fse_module_forward.3} parent=51 // pred_check_branch
        %587 = sbr.rel (%p585) target = $region56
      $region55: #{fse_module_forward.3} parent=51 // pred_region
        %s588 = smul.u32 2, %s24
        %p589 = scmp.lt.s32.totalorder %s23, 1
        %s590 = scalar_select %p589, %s23, 1
        %p591 = scmp.lt.s32.totalorder %s588, 1
        %s592 = scalar_select %p591, %s588, 1
        %s593 = smul.addr %s590, 4
        %s594 = sadd.s32 %s592, %s593
        %s595 = smul.addr %s594, 8
        %s596 = scalar_lea.vmem %s6, %s595
      $region56: #{fse_module_forward.3} parent=51 // pred_fallthru
        _
    $region52: #{fse_module_forward.3} parent=5 // pred_fallthru
      _
  $region6: #{fse_module_forward.3} parent=0 // loop_footer
    %s16 = sadd.s32 1, %s12
  $region7: #{fse_module_forward.3} parent=0 // loop_footer_branch
    %11 = sbr.rel target = $region3
  $region8: #{fse_module_forward.3} parent=0 // loop_exit
    _

</llo_original>
